<compile_context>
chip_gen: v7x
topology: tpu7x:2x2x1
jax: 0.10.0
libtpu: 0.0.40
codegen_flags: <defaults>
</compile_context>

<pallas_src>
import functools

import jax
import jax.numpy as jnp
from jax.experimental import pallas as pl
from jax.experimental.pallas import tpu as pltpu

TEXT_DIM = 384
STYLE_DIM = 128
HIDDEN_DIM = 256
IN_DIM = TEXT_DIM + STYLE_DIM      # 512
TOKENS_PER_SECOND = 75.0
LN_EPS = 1e-5

H1 = HIDDEN_DIM                    # 256
H2 = HIDDEN_DIM // 2               # 128
H3 = HIDDEN_DIM // 4               # 64

# "A @ B^T" contraction: contract the last dim of both operands.
NT_DIMS = (((1,), (1,)), ((), ()))


# ---------------------------------------------------------------------------
# In-kernel math helpers (f32 elementwise).
# ---------------------------------------------------------------------------
def _gelu(x):
    # tanh-approx GELU: lowers to the EUP (its own VLIW slot); within ~3e-3
    # of torch's erf GELU.
    return jax.nn.gelu(x, approximate=True)


def _layernorm(x, gamma, beta):
    mean = jnp.mean(x, axis=-1, keepdims=True)
    centered = x - mean
    var = jnp.mean(centered * centered, axis=-1, keepdims=True)
    return centered * jax.lax.rsqrt(var + LN_EPS) * gamma + beta


def _softplus(x):
    # Numerically stable softplus from exp/log only.
    return jnp.maximum(x, 0.0) + jnp.log(1.0 + jnp.exp(-jnp.abs(x)))


def _bf16(x):
    return x.astype(jnp.bfloat16)


# ---------------------------------------------------------------------------
# Pallas kernel: both MLP heads for one (batch row, L-tile) of tokens.
# ---------------------------------------------------------------------------
def regulator_kernel(
    xt_ref,                             # (1, tile_l, 384) f32   text block
    xs_ref,                             # (1, 1, 128)      f32   style row
    w_text_ref, w_style_ref, b1f_ref,   # split+fused first layer (384,384)/(128,384)/(1,384)
    g1_ref, be1_ref,                    # duration LN1       (1, 256)
    gc1_ref, bec1_ref,                  # confidence LN1     (1, 128)
    w2_ref, b2_ref, g2_ref, be2_ref,    # duration layer 2   (256, 256) + LN2
    w3_ref, b3_ref,                     # duration layer 3   (256, 128)
    wc2_ref, bc2_ref,                   # confidence layer 2 (128, 128)  [lanes 64: zero-padded]
    wout_ref, bout_ref,                 # fused final proj   (2, 256) / (2, 1)
    out_ref,                            # (1, 2, tile_l) f32 [row 0 pred ; row 1 conf]
):
    xt = _bf16(xt_ref[0])                                       # (tile_l, 384)
    xs = _bf16(xs_ref[0])                                       # (1, 128)

    # ---- fused first layers of both heads ----
    # style contribution computed once per tile and broadcast-added.
    style_term = jnp.dot(xs, w_style_ref[...],
                         preferred_element_type=jnp.float32)    # (1, 384)
    y0 = (jnp.dot(xt, w_text_ref[...], preferred_element_type=jnp.float32)
          + style_term + b1f_ref[...])                          # (tile_l, 384)
    h = y0[:, :H1]                                              # (tile_l, 256) duration head
    c = y0[:, H1:]                                              # (tile_l, 128) confidence head

    # ---- duration predictor ----
    h = _gelu(_layernorm(h, g1_ref[...], be1_ref[...]))
    h = jnp.dot(_bf16(h), w2_ref[...], preferred_element_type=jnp.float32) + b2_ref[...]
    h = _gelu(_layernorm(h, g2_ref[...], be2_ref[...]))
    h = _gelu(jnp.dot(_bf16(h), w3_ref[...], preferred_element_type=jnp.float32) + b3_ref[...])
    # h: (tile_l, 128)

    # ---- confidence predictor ----
    c = _gelu(_layernorm(c, gc1_ref[...], bec1_ref[...]))
    c = _gelu(jnp.dot(_bf16(c), wc2_ref[...], preferred_element_type=jnp.float32) + bc2_ref[...])
    # c: (tile_l, 128); lanes 64: are gelu(0) = 0 (zero-padded weights/bias).

    # ---- fused final projections: one NT dot -> (2, tile_l), lane-dense ----
    hc = jnp.concatenate([_bf16(h), _bf16(c)], axis=-1)         # (tile_l, 256), 128-aligned
    logits = jax.lax.dot_general(
        wout_ref[...], hc, dimension_numbers=NT_DIMS,
        preferred_element_type=jnp.float32) + bout_ref[...]     # (2, tile_l)

    # Row 0: duration (Softplus then forward's 0.03 + 0.25*sigmoid).
    # Row 1: confidence (sigmoid).  Applied via a row mask so the store is a
    # single unmasked lane-dense write; extra transcendentals on the wrong
    # row are negligible (2 x tile_l elements, EUP).
    row = jax.lax.broadcasted_iota(jnp.int32, logits.shape, 0)
    pred = 0.03 + 0.25 * jax.nn.sigmoid(_softplus(logits))
    conf = jax.nn.sigmoid(logits)
    out_ref[0] = jnp.where(row == 0, pred, conf)


# ---------------------------------------------------------------------------
# Parameter init (deterministic, synthetic — torch-style layout, f32).
# Weights stored (fan_in, fan_out) so the math is x @ W + b.
# ---------------------------------------------------------------------------
def init_params(key):
    def linear(k, fin, fout):
        kw, kb = jax.random.split(k)
        bound = 1.0 / (fin ** 0.5)
        w = jax.random.uniform(kw, (fin, fout), jnp.float32, -bound, bound)
        b = jax.random.uniform(kb, (1, fout), jnp.float32, -bound, bound)
        return w, b

    ks = jax.random.split(key, 7)
    p = {}
    # duration predictor
    p["w1"], p["b1"] = linear(ks[0], IN_DIM, H1)
    p["g1"], p["be1"] = jnp.ones((1, H1), jnp.float32), jnp.zeros((1, H1), jnp.float32)
    p["w2"], p["b2"] = linear(ks[1], H1, H1)
    p["g2"], p["be2"] = jnp.ones((1, H1), jnp.float32), jnp.zeros((1, H1), jnp.float32)
    p["w3"], p["b3"] = linear(ks[2], H1, H2)
    p["w4"], p["b4"] = linear(ks[3], H2, 1)
    # confidence predictor
    p["wc1"], p["bc1"] = linear(ks[4], IN_DIM, H2)
    p["gc1"], p["bec1"] = jnp.ones((1, H2), jnp.float32), jnp.zeros((1, H2), jnp.float32)
    p["wc2"], p["bc2"] = linear(ks[5], H2, H3)
    p["wc3"], p["bc3"] = linear(ks[6], H3, 1)
    return p


def pack_params(p):
    """Split / fuse / pad / transpose / cast raw params into the kernel list."""
    bf16, f32 = jnp.bfloat16, jnp.float32

    # First layers of both heads, split by input (text rows vs style rows) and
    # fused across heads on the output axis.
    w_text = jnp.concatenate([p["w1"][:TEXT_DIM], p["wc1"][:TEXT_DIM]], axis=1).astype(bf16)   # (384, 384)
    w_style = jnp.concatenate([p["w1"][TEXT_DIM:], p["wc1"][TEXT_DIM:]], axis=1).astype(bf16)  # (128, 384)
    b1f = jnp.concatenate([p["b1"], p["bc1"]], axis=1).astype(f32)                             # (1, 384)

    # Confidence layer 2 zero-padded 64 -> 128 output lanes (128-aligned concat
    # later; padded lanes contribute nothing).
    wc2p = jnp.concatenate([p["wc2"], jnp.zeros((H2, H2 - H3), f32)], axis=1).astype(bf16)     # (128, 128)
    bc2p = jnp.concatenate([p["bc2"], jnp.zeros((1, H2 - H3), f32)], axis=1).astype(f32)       # (1, 128)

    # Fused final projection: (2, 256) LHS for one NT dot.
    #   row 0: duration w4^T over h lanes [0, 128), zeros elsewhere
    #   row 1: confidence wc3^T over c lanes [128, 192), zeros elsewhere
    w_out = jnp.zeros((2, H1), f32)
    w_out = w_out.at[0, :H2].set(p["w4"][:, 0])
    w_out = w_out.at[1, H2:H2 + H3].set(p["wc3"][:, 0])
    w_out = w_out.astype(bf16)                                                                 # (2, 256)
    b_out = jnp.concatenate([p["b4"], p["bc3"]], axis=0).astype(f32)                           # (2, 1)

    return [
        w_text, w_style, b1f,
        p["g1"].astype(f32), p["be1"].astype(f32),
        p["gc1"].astype(f32), p["bec1"].astype(f32),
        p["w2"].astype(bf16), p["b2"].astype(f32),
        p["g2"].astype(f32), p["be2"].astype(f32),
        p["w3"].astype(bf16), p["b3"].astype(f32),
        wc2p, bc2p,
        w_out, b_out,
    ]


# ---------------------------------------------------------------------------
# Wrapper: raw inputs go straight into the kernel; only the trivial tokens
# tail and output slicing stay in JAX.
# ---------------------------------------------------------------------------
@functools.partial(jax.jit, static_argnames=("max_tile_l",))
def fixed_duration_regulator(text_features, style_embedding, params, max_tile_l=1024):
    assert max_tile_l % 128 == 0
    B, L, D = text_features.shape
    assert D == TEXT_DIM and style_embedding.shape == (B, STYLE_DIM)
    style3 = style_embedding.reshape(B, 1, STYLE_DIM)

    # L tiling: single full-extent tile (no padding, no (8,128) concerns) when
    # L fits; otherwise balanced 128-multiple tiles to minimize padded rows
    # while keeping the output block lane-dense.
    if L <= max_tile_l:
        tile_l, n_l = L, 1
    else:
        n_l = -(-L // max_tile_l)                       # cdiv
        tile_l = ((-(-L // n_l) + 127) // 128) * 128    # balanced, multiple of 128
    Lp = n_l * tile_l
    # If Lp > L the last text block is a ragged read (Pallas pads it; the
    # garbage rows land in out[..., L:Lp] and are sliced off below).

    grid = (B, n_l)
    text_spec = pl.BlockSpec((1, tile_l, TEXT_DIM), lambda b, l: (b, l, 0))
    style_spec = pl.BlockSpec((1, 1, STYLE_DIM), lambda b, l: (b, 0, 0))
    # Constant index maps: the pipeline stops re-fetching weights after step 0.
    param_specs = [pl.BlockSpec(p.shape, lambda b, l: (0, 0)) for p in params]
    out_spec = pl.BlockSpec((1, 2, tile_l), lambda b, l: (b, 0, l))

    out = pl.pallas_call(
        regulator_kernel,
        out_shape=jax.ShapeDtypeStruct((B, 2, Lp), jnp.float32),
        grid_spec=pltpu.PrefetchScalarGridSpec(
            num_scalar_prefetch=0,
            grid=grid,
            in_specs=[text_spec, style_spec] + param_specs,
            out_specs=out_spec,
        ),
        compiler_params=pltpu.CompilerParams(
            # Both axes independent; with B >= 2 the grid has >= 2 steps so
            # v7x's two TensorCores both get work.
            dimension_semantics=("parallel", "parallel"),
            # Headroom for 1024+ row tiles on v5e's 16 MiB scoped default,
            # still under v7x's 64 MiB physical VMEM.
            vmem_limit_bytes=48 * 1024 * 1024,
        ),
    )(text_features, style3, *params)

    predicted_durations = out[:, 0, :L]                         # (B, L)
    duration_confidence = out[:, 1, :L]                         # (B, L)
    duration_tokens = jnp.clip(
        jnp.round(predicted_durations * TOKENS_PER_SECOND), 2.0, 21.0
    ).astype(jnp.int32)

    # Matches torch forward return: (text_features, predicted_durations,
    # duration_tokens, duration_confidence)
    return text_features, predicted_durations, duration_tokens, duration_confidence


# ---------------------------------------------------------------------------
# Pure-JAX reference (f32, exact erf GELU) for correctness checking.
# ---------------------------------------------------------------------------
def reference_forward(text_features, style_embedding, p):
    B, L, _ = text_features.shape
    style = jnp.broadcast_to(
        style_embedding[:, None, :], (B, L, style_embedding.shape[-1])
    )
    x = jnp.concatenate([text_features, style], axis=-1)

    def ln(v, g, b):
        m = jnp.mean(v, -1, keepdims=True)
        cc = v - m
        var = jnp.mean(cc * cc, -1, keepdims=True)
        return cc * jax.lax.rsqrt(var + LN_EPS) * g + b

    gelu = lambda v: jax.nn.gelu(v, approximate=False)

    h = x @ p["w1"] + p["b1"]
    h = gelu(ln(h, p["g1"], p["be1"]))
    h = gelu(ln(h @ p["w2"] + p["b2"], p["g2"], p["be2"]))
    h = gelu(h @ p["w3"] + p["b3"])
    raw = jax.nn.softplus(h @ p["w4"] + p["b4"])[..., 0]
    pred = 0.03 + 0.25 * jax.nn.sigmoid(raw)

    c = x @ p["wc1"] + p["bc1"]
    c = gelu(ln(c, p["gc1"], p["bec1"]))
    c = gelu(c @ p["wc2"] + p["bc2"])
    conf = jax.nn.sigmoid(c @ p["wc3"] + p["bc3"])[..., 0]

    tok = jnp.clip(jnp.round(pred * TOKENS_PER_SECOND), 2.0, 21.0).astype(jnp.int32)
    return pred, tok, conf


def _check(text_features, style_embedding, params, raw_params, **kw):
    outs = jax.block_until_ready(
        fixed_duration_regulator(text_features, style_embedding, params, **kw))
    tf, pred, tok, conf = outs
    B, L, _ = text_features.shape
    assert tf.shape == (B, L, TEXT_DIM)
    assert pred.shape == (B, L) and pred.dtype == jnp.float32
    assert tok.shape == (B, L) and tok.dtype == jnp.int32
    assert conf.shape == (B, L) and conf.dtype == jnp.float32
    assert bool(jnp.all((pred >= 0.03) & (pred <= 0.28)))
    assert bool(jnp.all((tok >= 2) & (tok <= 21)))
    assert bool(jnp.all((conf >= 0.0) & (conf <= 1.0)))
    ref_pred, ref_tok, ref_conf = reference_forward(text_features, style_embedding, raw_params)
    # loose tol: bf16 MXU inputs + tanh-approx GELU in the kernel
    assert float(jnp.max(jnp.abs(pred - ref_pred))) < 0.05
    assert float(jnp.max(jnp.abs(conf - ref_conf))) < 0.05
    assert int(jnp.max(jnp.abs(tok - ref_tok))) <= 2


if __name__ == "__main__":
    key = jax.random.PRNGKey(0)
    k_text, k_style, k_params, k_text2, k_style2 = jax.random.split(key, 5)

    raw_params = init_params(k_params)
    params = pack_params(raw_params)

    # Small shape from the module spec: batch=2, seq=8.
    B, L = 2, 8
    text_features = jax.random.normal(k_text, (B, L, TEXT_DIM), jnp.float32)
    style_embedding = jax.random.normal(k_style, (B, STYLE_DIM), jnp.float32)
    _check(text_features, style_embedding, params, raw_params)

    # Multi-tile path (grid = (B, 2), lane-dense 128-wide output blocks).
    text_big = jax.random.normal(k_text2, (2, 256, TEXT_DIM), jnp.float32)
    style_big = jax.random.normal(k_style2, (2, STYLE_DIM), jnp.float32)
    _check(text_big, style_big, params, raw_params, max_tile_l=128)

    print("KERNEL_OK")
</pallas_src>

<mosaic_0001>
module attributes {stable_mosaic.version = 11 : i64} {
  func.func @regulator_kernel(%arg0: i32, %arg1: i32, %arg2: memref<1x8x384xf32, #tpu.memory_space<vmem>>, %arg3: memref<1x1x128xf32, #tpu.memory_space<vmem>>, %arg4: memref<384x384xbf16, #tpu.memory_space<vmem>>, %arg5: memref<128x384xbf16, #tpu.memory_space<vmem>>, %arg6: memref<1x384xf32, #tpu.memory_space<vmem>>, %arg7: memref<1x256xf32, #tpu.memory_space<vmem>>, %arg8: memref<1x256xf32, #tpu.memory_space<vmem>>, %arg9: memref<1x128xf32, #tpu.memory_space<vmem>>, %arg10: memref<1x128xf32, #tpu.memory_space<vmem>>, %arg11: memref<256x256xbf16, #tpu.memory_space<vmem>>, %arg12: memref<1x256xf32, #tpu.memory_space<vmem>>, %arg13: memref<1x256xf32, #tpu.memory_space<vmem>>, %arg14: memref<1x256xf32, #tpu.memory_space<vmem>>, %arg15: memref<256x128xbf16, #tpu.memory_space<vmem>>, %arg16: memref<1x128xf32, #tpu.memory_space<vmem>>, %arg17: memref<128x128xbf16, #tpu.memory_space<vmem>>, %arg18: memref<1x128xf32, #tpu.memory_space<vmem>>, %arg19: memref<2x256xbf16, #tpu.memory_space<vmem>>, %arg20: memref<2x1xf32, #tpu.memory_space<vmem>>, %arg21: memref<1x2x8xf32, #tpu.memory_space<vmem>>) attributes {dimension_semantics = [#tpu.dimension_semantics<parallel>, #tpu.dimension_semantics<parallel>], iteration_bounds = array<i64: 2, 1>, scalar_prefetch = 0 : i64, scratch_operands = 0 : i64, tpu.core_type = #tpu.core_type<tc>, window_params = [{transform_indices = @transform_0, window_bounds = array<i64: 1, 8, 384>}, {transform_indices = @transform_1, window_bounds = array<i64: 1, 1, 128>}, {pipeline_mode = #tpu.pipeline_mode<synchronous>, transform_indices = @transform_2, window_bounds = array<i64: 384, 384>}, {pipeline_mode = #tpu.pipeline_mode<synchronous>, transform_indices = @transform_3, window_bounds = array<i64: 128, 384>}, {pipeline_mode = #tpu.pipeline_mode<synchronous>, transform_indices = @transform_4, window_bounds = array<i64: 1, 384>}, {pipeline_mode = #tpu.pipeline_mode<synchronous>, transform_indices = @transform_5, window_bounds = array<i64: 1, 256>}, {pipeline_mode = #tpu.pipeline_mode<synchronous>, transform_indices = @transform_6, window_bounds = array<i64: 1, 256>}, {pipeline_mode = #tpu.pipeline_mode<synchronous>, transform_indices = @transform_7, window_bounds = array<i64: 1, 128>}, {pipeline_mode = #tpu.pipeline_mode<synchronous>, transform_indices = @transform_8, window_bounds = array<i64: 1, 128>}, {pipeline_mode = #tpu.pipeline_mode<synchronous>, transform_indices = @transform_9, window_bounds = array<i64: 256, 256>}, {pipeline_mode = #tpu.pipeline_mode<synchronous>, transform_indices = @transform_10, window_bounds = array<i64: 1, 256>}, {pipeline_mode = #tpu.pipeline_mode<synchronous>, transform_indices = @transform_11, window_bounds = array<i64: 1, 256>}, {pipeline_mode = #tpu.pipeline_mode<synchronous>, transform_indices = @transform_12, window_bounds = array<i64: 1, 256>}, {pipeline_mode = #tpu.pipeline_mode<synchronous>, transform_indices = @transform_13, window_bounds = array<i64: 256, 128>}, {pipeline_mode = #tpu.pipeline_mode<synchronous>, transform_indices = @transform_14, window_bounds = array<i64: 1, 128>}, {pipeline_mode = #tpu.pipeline_mode<synchronous>, transform_indices = @transform_15, window_bounds = array<i64: 128, 128>}, {pipeline_mode = #tpu.pipeline_mode<synchronous>, transform_indices = @transform_16, window_bounds = array<i64: 1, 128>}, {pipeline_mode = #tpu.pipeline_mode<synchronous>, transform_indices = @transform_17, window_bounds = array<i64: 2, 256>}, {pipeline_mode = #tpu.pipeline_mode<synchronous>, transform_indices = @transform_18, window_bounds = array<i64: 2, 1>}, {transform_indices = @transform_19, window_bounds = array<i64: 1, 2, 8>}]} {
    %c0 = arith.constant 0 : index
    %c0_0 = arith.constant 0 : index
    %c0_1 = arith.constant 0 : index
    %0 = vector.load %arg2[%c0, %c0_0, %c0_1] : memref<1x8x384xf32, #tpu.memory_space<vmem>>, vector<1x8x384xf32>
    %1 = vector.shape_cast %0 : vector<1x8x384xf32> to vector<8x384xf32>
    %2 = arith.truncf %1 : vector<8x384xf32> to vector<8x384xbf16>
    %c0_2 = arith.constant 0 : index
    %c0_3 = arith.constant 0 : index
    %c0_4 = arith.constant 0 : index
    %3 = vector.load %arg3[%c0_2, %c0_3, %c0_4] : memref<1x1x128xf32, #tpu.memory_space<vmem>>, vector<1x1x128xf32>
    %4 = vector.shape_cast %3 : vector<1x1x128xf32> to vector<1x128xf32>
    %5 = arith.truncf %4 : vector<1x128xf32> to vector<1x128xbf16>
    %c0_5 = arith.constant 0 : index
    %c0_6 = arith.constant 0 : index
    %6 = vector.load %arg5[%c0_5, %c0_6] : memref<128x384xbf16, #tpu.memory_space<vmem>>, vector<128x384xbf16>
    %cst = arith.constant dense<0.000000e+00> : vector<1x384xf32>
    %7 = tpu.matmul %5, %6, %cst {dimension_numbers = #tpu.dot_dimension_numbers<[1], [0], [0], [1], [0, 0, 1, 1], [], []>} : vector<1x128xbf16>, vector<128x384xbf16>, vector<1x384xf32> -> vector<1x384xf32>
    %c0_7 = arith.constant 0 : index
    %c0_8 = arith.constant 0 : index
    %8 = vector.load %arg4[%c0_7, %c0_8] : memref<384x384xbf16, #tpu.memory_space<vmem>>, vector<384x384xbf16>
    %cst_9 = arith.constant dense<0.000000e+00> : vector<8x384xf32>
    %9 = tpu.matmul %2, %8, %cst_9 {dimension_numbers = #tpu.dot_dimension_numbers<[1], [0], [0], [1], [0, 0, 1, 1], [], []>} : vector<8x384xbf16>, vector<384x384xbf16>, vector<8x384xf32> -> vector<8x384xf32>
    %10 = vector.broadcast %7 : vector<1x384xf32> to vector<8x384xf32>
    %11 = arith.addf %9, %10 : vector<8x384xf32>
    %c0_10 = arith.constant 0 : index
    %c0_11 = arith.constant 0 : index
    %12 = vector.load %arg6[%c0_10, %c0_11] : memref<1x384xf32, #tpu.memory_space<vmem>>, vector<1x384xf32>
    %13 = vector.broadcast %12 : vector<1x384xf32> to vector<8x384xf32>
    %14 = arith.addf %11, %13 : vector<8x384xf32>
    %15 = vector.extract_strided_slice %14 {offsets = [0, 0], sizes = [8, 256], strides = [1, 1]} : vector<8x384xf32> to vector<8x256xf32>
    %16 = vector.extract_strided_slice %14 {offsets = [0, 256], sizes = [8, 128], strides = [1, 1]} : vector<8x384xf32> to vector<8x128xf32>
    %c0_12 = arith.constant 0 : index
    %c0_13 = arith.constant 0 : index
    %17 = vector.load %arg7[%c0_12, %c0_13] : memref<1x256xf32, #tpu.memory_space<vmem>>, vector<1x256xf32>
    %c0_14 = arith.constant 0 : index
    %c0_15 = arith.constant 0 : index
    %18 = vector.load %arg8[%c0_14, %c0_15] : memref<1x256xf32, #tpu.memory_space<vmem>>, vector<1x256xf32>
    %cst_16 = arith.constant dense<0.000000e+00> : vector<8xf32>
    %19 = vector.multi_reduction <add>, %15, %cst_16 [1] : vector<8x256xf32> to vector<8xf32>
    %20 = vector.shape_cast %19 : vector<8xf32> to vector<8x1xf32>
    %cst_17 = arith.constant 2.560000e+02 : f32
    %21 = vector.broadcast %cst_17 : f32 to vector<8x1xf32>
    %22 = arith.divf %20, %21 : vector<8x1xf32>
    %23 = vector.broadcast %22 : vector<8x1xf32> to vector<8x256xf32>
    %24 = arith.subf %15, %23 : vector<8x256xf32>
    %25 = arith.mulf %24, %24 : vector<8x256xf32>
    %cst_18 = arith.constant dense<0.000000e+00> : vector<8xf32>
    %26 = vector.multi_reduction <add>, %25, %cst_18 [1] : vector<8x256xf32> to vector<8xf32>
    %27 = vector.shape_cast %26 : vector<8xf32> to vector<8x1xf32>
    %cst_19 = arith.constant 2.560000e+02 : f32
    %28 = vector.broadcast %cst_19 : f32 to vector<8x1xf32>
    %29 = arith.divf %27, %28 : vector<8x1xf32>
    %cst_20 = arith.constant 9.99999974E-6 : f32
    %30 = vector.broadcast %cst_20 : f32 to vector<8x1xf32>
    %31 = arith.addf %29, %30 : vector<8x1xf32>
    %32 = math.rsqrt %31 : vector<8x1xf32>
    %33 = vector.broadcast %32 : vector<8x1xf32> to vector<8x256xf32>
    %34 = arith.mulf %24, %33 : vector<8x256xf32>
    %35 = vector.broadcast %17 : vector<1x256xf32> to vector<8x256xf32>
    %36 = arith.mulf %34, %35 : vector<8x256xf32>
    %37 = vector.broadcast %18 : vector<1x256xf32> to vector<8x256xf32>
    %38 = arith.addf %36, %37 : vector<8x256xf32>
    %39 = arith.mulf %38, %38 : vector<8x256xf32>
    %40 = arith.mulf %38, %39 : vector<8x256xf32>
    %cst_21 = arith.constant 4.471500e-02 : f32
    %41 = vector.broadcast %cst_21 : f32 to vector<8x256xf32>
    %42 = arith.mulf %41, %40 : vector<8x256xf32>
    %43 = arith.addf %38, %42 : vector<8x256xf32>
    %cst_22 = arith.constant 0.797884583 : f32
    %44 = vector.broadcast %cst_22 : f32 to vector<8x256xf32>
    %45 = arith.mulf %44, %43 : vector<8x256xf32>
    %46 = math.tanh %45 : vector<8x256xf32>
    %cst_23 = arith.constant 1.000000e+00 : f32
    %47 = vector.broadcast %cst_23 : f32 to vector<8x256xf32>
    %48 = arith.addf %47, %46 : vector<8x256xf32>
    %cst_24 = arith.constant 5.000000e-01 : f32
    %49 = vector.broadcast %cst_24 : f32 to vector<8x256xf32>
    %50 = arith.mulf %49, %48 : vector<8x256xf32>
    %51 = arith.mulf %38, %50 : vector<8x256xf32>
    %52 = arith.truncf %51 : vector<8x256xf32> to vector<8x256xbf16>
    %c0_25 = arith.constant 0 : index
    %c0_26 = arith.constant 0 : index
    %53 = vector.load %arg11[%c0_25, %c0_26] : memref<256x256xbf16, #tpu.memory_space<vmem>>, vector<256x256xbf16>
    %cst_27 = arith.constant dense<0.000000e+00> : vector<8x256xf32>
    %54 = tpu.matmul %52, %53, %cst_27 {dimension_numbers = #tpu.dot_dimension_numbers<[1], [0], [0], [1], [0, 0, 1, 1], [], []>} : vector<8x256xbf16>, vector<256x256xbf16>, vector<8x256xf32> -> vector<8x256xf32>
    %c0_28 = arith.constant 0 : index
    %c0_29 = arith.constant 0 : index
    %55 = vector.load %arg12[%c0_28, %c0_29] : memref<1x256xf32, #tpu.memory_space<vmem>>, vector<1x256xf32>
    %56 = vector.broadcast %55 : vector<1x256xf32> to vector<8x256xf32>
    %57 = arith.addf %54, %56 : vector<8x256xf32>
    %c0_30 = arith.constant 0 : index
    %c0_31 = arith.constant 0 : index
    %58 = vector.load %arg13[%c0_30, %c0_31] : memref<1x256xf32, #tpu.memory_space<vmem>>, vector<1x256xf32>
    %c0_32 = arith.constant 0 : index
    %c0_33 = arith.constant 0 : index
    %59 = vector.load %arg14[%c0_32, %c0_33] : memref<1x256xf32, #tpu.memory_space<vmem>>, vector<1x256xf32>
    %cst_34 = arith.constant dense<0.000000e+00> : vector<8xf32>
    %60 = vector.multi_reduction <add>, %57, %cst_34 [1] : vector<8x256xf32> to vector<8xf32>
    %61 = vector.shape_cast %60 : vector<8xf32> to vector<8x1xf32>
    %cst_35 = arith.constant 2.560000e+02 : f32
    %62 = vector.broadcast %cst_35 : f32 to vector<8x1xf32>
    %63 = arith.divf %61, %62 : vector<8x1xf32>
    %64 = vector.broadcast %63 : vector<8x1xf32> to vector<8x256xf32>
    %65 = arith.subf %57, %64 : vector<8x256xf32>
    %66 = arith.mulf %65, %65 : vector<8x256xf32>
    %cst_36 = arith.constant dense<0.000000e+00> : vector<8xf32>
    %67 = vector.multi_reduction <add>, %66, %cst_36 [1] : vector<8x256xf32> to vector<8xf32>
    %68 = vector.shape_cast %67 : vector<8xf32> to vector<8x1xf32>
    %cst_37 = arith.constant 2.560000e+02 : f32
    %69 = vector.broadcast %cst_37 : f32 to vector<8x1xf32>
    %70 = arith.divf %68, %69 : vector<8x1xf32>
    %cst_38 = arith.constant 9.99999974E-6 : f32
    %71 = vector.broadcast %cst_38 : f32 to vector<8x1xf32>
    %72 = arith.addf %70, %71 : vector<8x1xf32>
    %73 = math.rsqrt %72 : vector<8x1xf32>
    %74 = vector.broadcast %73 : vector<8x1xf32> to vector<8x256xf32>
    %75 = arith.mulf %65, %74 : vector<8x256xf32>
    %76 = vector.broadcast %58 : vector<1x256xf32> to vector<8x256xf32>
    %77 = arith.mulf %75, %76 : vector<8x256xf32>
    %78 = vector.broadcast %59 : vector<1x256xf32> to vector<8x256xf32>
    %79 = arith.addf %77, %78 : vector<8x256xf32>
    %80 = arith.mulf %79, %79 : vector<8x256xf32>
    %81 = arith.mulf %79, %80 : vector<8x256xf32>
    %cst_39 = arith.constant 4.471500e-02 : f32
    %82 = vector.broadcast %cst_39 : f32 to vector<8x256xf32>
    %83 = arith.mulf %82, %81 : vector<8x256xf32>
    %84 = arith.addf %79, %83 : vector<8x256xf32>
    %cst_40 = arith.constant 0.797884583 : f32
    %85 = vector.broadcast %cst_40 : f32 to vector<8x256xf32>
    %86 = arith.mulf %85, %84 : vector<8x256xf32>
    %87 = math.tanh %86 : vector<8x256xf32>
    %cst_41 = arith.constant 1.000000e+00 : f32
    %88 = vector.broadcast %cst_41 : f32 to vector<8x256xf32>
    %89 = arith.addf %88, %87 : vector<8x256xf32>
    %cst_42 = arith.constant 5.000000e-01 : f32
    %90 = vector.broadcast %cst_42 : f32 to vector<8x256xf32>
    %91 = arith.mulf %90, %89 : vector<8x256xf32>
    %92 = arith.mulf %79, %91 : vector<8x256xf32>
    %93 = arith.truncf %92 : vector<8x256xf32> to vector<8x256xbf16>
    %c0_43 = arith.constant 0 : index
    %c0_44 = arith.constant 0 : index
    %94 = vector.load %arg15[%c0_43, %c0_44] : memref<256x128xbf16, #tpu.memory_space<vmem>>, vector<256x128xbf16>
    %cst_45 = arith.constant dense<0.000000e+00> : vector<8x128xf32>
    %95 = tpu.matmul %93, %94, %cst_45 {dimension_numbers = #tpu.dot_dimension_numbers<[1], [0], [0], [1], [0, 0, 1, 1], [], []>} : vector<8x256xbf16>, vector<256x128xbf16>, vector<8x128xf32> -> vector<8x128xf32>
    %c0_46 = arith.constant 0 : index
    %c0_47 = arith.constant 0 : index
    %96 = vector.load %arg16[%c0_46, %c0_47] : memref<1x128xf32, #tpu.memory_space<vmem>>, vector<1x128xf32>
    %97 = vector.broadcast %96 : vector<1x128xf32> to vector<8x128xf32>
    %98 = arith.addf %95, %97 : vector<8x128xf32>
    %99 = arith.mulf %98, %98 : vector<8x128xf32>
    %100 = arith.mulf %98, %99 : vector<8x128xf32>
    %cst_48 = arith.constant 4.471500e-02 : f32
    %101 = vector.broadcast %cst_48 : f32 to vector<8x128xf32>
    %102 = arith.mulf %101, %100 : vector<8x128xf32>
    %103 = arith.addf %98, %102 : vector<8x128xf32>
    %cst_49 = arith.constant 0.797884583 : f32
    %104 = vector.broadcast %cst_49 : f32 to vector<8x128xf32>
    %105 = arith.mulf %104, %103 : vector<8x128xf32>
    %106 = math.tanh %105 : vector<8x128xf32>
    %cst_50 = arith.constant 1.000000e+00 : f32
    %107 = vector.broadcast %cst_50 : f32 to vector<8x128xf32>
    %108 = arith.addf %107, %106 : vector<8x128xf32>
    %cst_51 = arith.constant 5.000000e-01 : f32
    %109 = vector.broadcast %cst_51 : f32 to vector<8x128xf32>
    %110 = arith.mulf %109, %108 : vector<8x128xf32>
    %111 = arith.mulf %98, %110 : vector<8x128xf32>
    %c0_52 = arith.constant 0 : index
    %c0_53 = arith.constant 0 : index
    %112 = vector.load %arg9[%c0_52, %c0_53] : memref<1x128xf32, #tpu.memory_space<vmem>>, vector<1x128xf32>
    %c0_54 = arith.constant 0 : index
    %c0_55 = arith.constant 0 : index
    %113 = vector.load %arg10[%c0_54, %c0_55] : memref<1x128xf32, #tpu.memory_space<vmem>>, vector<1x128xf32>
    %cst_56 = arith.constant dense<0.000000e+00> : vector<8xf32>
    %114 = vector.multi_reduction <add>, %16, %cst_56 [1] : vector<8x128xf32> to vector<8xf32>
    %115 = vector.shape_cast %114 : vector<8xf32> to vector<8x1xf32>
    %cst_57 = arith.constant 1.280000e+02 : f32
    %116 = vector.broadcast %cst_57 : f32 to vector<8x1xf32>
    %117 = arith.divf %115, %116 : vector<8x1xf32>
    %118 = vector.broadcast %117 : vector<8x1xf32> to vector<8x128xf32>
    %119 = arith.subf %16, %118 : vector<8x128xf32>
    %120 = arith.mulf %119, %119 : vector<8x128xf32>
    %cst_58 = arith.constant dense<0.000000e+00> : vector<8xf32>
    %121 = vector.multi_reduction <add>, %120, %cst_58 [1] : vector<8x128xf32> to vector<8xf32>
    %122 = vector.shape_cast %121 : vector<8xf32> to vector<8x1xf32>
    %cst_59 = arith.constant 1.280000e+02 : f32
    %123 = vector.broadcast %cst_59 : f32 to vector<8x1xf32>
    %124 = arith.divf %122, %123 : vector<8x1xf32>
    %cst_60 = arith.constant 9.99999974E-6 : f32
    %125 = vector.broadcast %cst_60 : f32 to vector<8x1xf32>
    %126 = arith.addf %124, %125 : vector<8x1xf32>
    %127 = math.rsqrt %126 : vector<8x1xf32>
    %128 = vector.broadcast %127 : vector<8x1xf32> to vector<8x128xf32>
    %129 = arith.mulf %119, %128 : vector<8x128xf32>
    %130 = vector.broadcast %112 : vector<1x128xf32> to vector<8x128xf32>
    %131 = arith.mulf %129, %130 : vector<8x128xf32>
    %132 = vector.broadcast %113 : vector<1x128xf32> to vector<8x128xf32>
    %133 = arith.addf %131, %132 : vector<8x128xf32>
    %134 = arith.mulf %133, %133 : vector<8x128xf32>
    %135 = arith.mulf %133, %134 : vector<8x128xf32>
    %cst_61 = arith.constant 4.471500e-02 : f32
    %136 = vector.broadcast %cst_61 : f32 to vector<8x128xf32>
    %137 = arith.mulf %136, %135 : vector<8x128xf32>
    %138 = arith.addf %133, %137 : vector<8x128xf32>
    %cst_62 = arith.constant 0.797884583 : f32
    %139 = vector.broadcast %cst_62 : f32 to vector<8x128xf32>
    %140 = arith.mulf %139, %138 : vector<8x128xf32>
    %141 = math.tanh %140 : vector<8x128xf32>
    %cst_63 = arith.constant 1.000000e+00 : f32
    %142 = vector.broadcast %cst_63 : f32 to vector<8x128xf32>
    %143 = arith.addf %142, %141 : vector<8x128xf32>
    %cst_64 = arith.constant 5.000000e-01 : f32
    %144 = vector.broadcast %cst_64 : f32 to vector<8x128xf32>
    %145 = arith.mulf %144, %143 : vector<8x128xf32>
    %146 = arith.mulf %133, %145 : vector<8x128xf32>
    %147 = arith.truncf %146 : vector<8x128xf32> to vector<8x128xbf16>
    %c0_65 = arith.constant 0 : index
    %c0_66 = arith.constant 0 : index
    %148 = vector.load %arg17[%c0_65, %c0_66] : memref<128x128xbf16, #tpu.memory_space<vmem>>, vector<128x128xbf16>
    %cst_67 = arith.constant dense<0.000000e+00> : vector<8x128xf32>
    %149 = tpu.matmul %147, %148, %cst_67 {dimension_numbers = #tpu.dot_dimension_numbers<[1], [0], [0], [1], [0, 0, 1, 1], [], []>} : vector<8x128xbf16>, vector<128x128xbf16>, vector<8x128xf32> -> vector<8x128xf32>
    %c0_68 = arith.constant 0 : index
    %c0_69 = arith.constant 0 : index
    %150 = vector.load %arg18[%c0_68, %c0_69] : memref<1x128xf32, #tpu.memory_space<vmem>>, vector<1x128xf32>
    %151 = vector.broadcast %150 : vector<1x128xf32> to vector<8x128xf32>
    %152 = arith.addf %149, %151 : vector<8x128xf32>
    %153 = arith.mulf %152, %152 : vector<8x128xf32>
    %154 = arith.mulf %152, %153 : vector<8x128xf32>
    %cst_70 = arith.constant 4.471500e-02 : f32
    %155 = vector.broadcast %cst_70 : f32 to vector<8x128xf32>
    %156 = arith.mulf %155, %154 : vector<8x128xf32>
    %157 = arith.addf %152, %156 : vector<8x128xf32>
    %cst_71 = arith.constant 0.797884583 : f32
    %158 = vector.broadcast %cst_71 : f32 to vector<8x128xf32>
    %159 = arith.mulf %158, %157 : vector<8x128xf32>
    %160 = math.tanh %159 : vector<8x128xf32>
    %cst_72 = arith.constant 1.000000e+00 : f32
    %161 = vector.broadcast %cst_72 : f32 to vector<8x128xf32>
    %162 = arith.addf %161, %160 : vector<8x128xf32>
    %cst_73 = arith.constant 5.000000e-01 : f32
    %163 = vector.broadcast %cst_73 : f32 to vector<8x128xf32>
    %164 = arith.mulf %163, %162 : vector<8x128xf32>
    %165 = arith.mulf %152, %164 : vector<8x128xf32>
    %166 = arith.truncf %111 : vector<8x128xf32> to vector<8x128xbf16>
    %167 = arith.truncf %165 : vector<8x128xf32> to vector<8x128xbf16>
    %168 = tpu.concatenate %166, %167 in 1 : vector<8x128xbf16>, vector<8x128xbf16> -> vector<8x256xbf16>
    %c0_74 = arith.constant 0 : index
    %c0_75 = arith.constant 0 : index
    %169 = vector.load %arg19[%c0_74, %c0_75] : memref<2x256xbf16, #tpu.memory_space<vmem>>, vector<2x256xbf16>
    %cst_76 = arith.constant dense<0.000000e+00> : vector<2x8xf32>
    %170 = tpu.matmul %169, %168, %cst_76 {dimension_numbers = #tpu.dot_dimension_numbers<[1], [1], [0], [0], [0, 0, 1, 0], [], []>} : vector<2x256xbf16>, vector<8x256xbf16>, vector<2x8xf32> -> vector<2x8xf32>
    %c0_77 = arith.constant 0 : index
    %c0_78 = arith.constant 0 : index
    %171 = vector.load %arg20[%c0_77, %c0_78] : memref<2x1xf32, #tpu.memory_space<vmem>>, vector<2x1xf32>
    %172 = vector.broadcast %171 : vector<2x1xf32> to vector<2x8xf32>
    %173 = arith.addf %170, %172 : vector<2x8xf32>
    %174 = tpu.iota {dimensions = array<i32: 0>} : vector<2x8xi32>
    %cst_79 = arith.constant 0.000000e+00 : f32
    %175 = vector.broadcast %cst_79 : f32 to vector<2x8xf32>
    %176 = arith.maximumf %173, %175 : vector<2x8xf32>
    %177 = math.absf %173 : vector<2x8xf32>
    %cst_80 = arith.constant 0.000000e+00 : f32
    %178 = vector.broadcast %cst_80 : f32 to vector<2x8xf32>
    %179 = arith.subf %178, %177 : vector<2x8xf32>
    %180 = math.exp %179 : vector<2x8xf32>
    %cst_81 = arith.constant 1.000000e+00 : f32
    %181 = vector.broadcast %cst_81 : f32 to vector<2x8xf32>
    %182 = arith.addf %181, %180 : vector<2x8xf32>
    %183 = math.log %182 : vector<2x8xf32>
    %184 = arith.addf %176, %183 : vector<2x8xf32>
    %185 = arith.negf %184 : vector<2x8xf32>
    %186 = math.exp %185 : vector<2x8xf32>
    %cst_82 = arith.constant 1.000000e+00 : f32
    %187 = vector.broadcast %cst_82 : f32 to vector<2x8xf32>
    %188 = arith.addf %187, %186 : vector<2x8xf32>
    %189 = arith.divf %187, %188 : vector<2x8xf32>
    %cst_83 = arith.constant 2.500000e-01 : f32
    %190 = vector.broadcast %cst_83 : f32 to vector<2x8xf32>
    %191 = arith.mulf %190, %189 : vector<2x8xf32>
    %cst_84 = arith.constant 3.000000e-02 : f32
    %192 = vector.broadcast %cst_84 : f32 to vector<2x8xf32>
    %193 = arith.addf %192, %191 : vector<2x8xf32>
    %194 = arith.negf %173 : vector<2x8xf32>
    %195 = math.exp %194 : vector<2x8xf32>
    %cst_85 = arith.constant 1.000000e+00 : f32
    %196 = vector.broadcast %cst_85 : f32 to vector<2x8xf32>
    %197 = arith.addf %196, %195 : vector<2x8xf32>
    %198 = arith.divf %196, %197 : vector<2x8xf32>
    %c0_i32 = arith.constant 0 : i32
    %199 = vector.broadcast %c0_i32 : i32 to vector<2x8xi32>
    %200 = arith.cmpi eq, %174, %199 : vector<2x8xi32>
    %201 = arith.select %200, %193, %198 : vector<2x8xi1>, vector<2x8xf32>
    %c0_86 = arith.constant 0 : index
    %c0_87 = arith.constant 0 : index
    %c0_88 = arith.constant 0 : index
    %202 = vector.load %arg21[%c0_86, %c0_87, %c0_88] : memref<1x2x8xf32, #tpu.memory_space<vmem>>, vector<1x2x8xf32>
    %203 = vector.shape_cast %202 : vector<1x2x8xf32> to vector<2x8xf32>
    %204 = vector.shape_cast %201 : vector<2x8xf32> to vector<1x2x8xf32>
    tpu.vector_store %arg21[%c0_86, %c0_87, %c0_88], %204 {strides = array<i32>} : memref<1x2x8xf32, #tpu.memory_space<vmem>>, vector<1x2x8xf32>,
    return
  }
  func.func @transform_0(%arg0: i32, %arg1: i32) -> (i32, i32, i32) {
    %c0_i32 = arith.constant 0 : i32
    %c0_i32_0 = arith.constant 0 : i32
    return %arg0, %arg1, %c0_i32 : i32, i32, i32
  }
  func.func @transform_1(%arg0: i32, %arg1: i32) -> (i32, i32, i32) {
    %c0_i32 = arith.constant 0 : i32
    %c0_i32_0 = arith.constant 0 : i32
    %c0_i32_1 = arith.constant 0 : i32
    return %arg0, %c0_i32, %c0_i32_0 : i32, i32, i32
  }
  func.func @transform_2(%arg0: i32, %arg1: i32) -> (i32, i32) {
    %c0_i32 = arith.constant 0 : i32
    %c0_i32_0 = arith.constant 0 : i32
    %c0_i32_1 = arith.constant 0 : i32
    return %c0_i32, %c0_i32_0 : i32, i32
  }
  func.func @transform_3(%arg0: i32, %arg1: i32) -> (i32, i32) {
    %c0_i32 = arith.constant 0 : i32
    %c0_i32_0 = arith.constant 0 : i32
    %c0_i32_1 = arith.constant 0 : i32
    return %c0_i32, %c0_i32_0 : i32, i32
  }
  func.func @transform_4(%arg0: i32, %arg1: i32) -> (i32, i32) {
    %c0_i32 = arith.constant 0 : i32
    %c0_i32_0 = arith.constant 0 : i32
    %c0_i32_1 = arith.constant 0 : i32
    return %c0_i32, %c0_i32_0 : i32, i32
  }
  func.func @transform_5(%arg0: i32, %arg1: i32) -> (i32, i32) {
    %c0_i32 = arith.constant 0 : i32
    %c0_i32_0 = arith.constant 0 : i32
    %c0_i32_1 = arith.constant 0 : i32
    return %c0_i32, %c0_i32_0 : i32, i32
  }
  func.func @transform_6(%arg0: i32, %arg1: i32) -> (i32, i32) {
    %c0_i32 = arith.constant 0 : i32
    %c0_i32_0 = arith.constant 0 : i32
    %c0_i32_1 = arith.constant 0 : i32
    return %c0_i32, %c0_i32_0 : i32, i32
  }
  func.func @transform_7(%arg0: i32, %arg1: i32) -> (i32, i32) {
    %c0_i32 = arith.constant 0 : i32
    %c0_i32_0 = arith.constant 0 : i32
    %c0_i32_1 = arith.constant 0 : i32
    return %c0_i32, %c0_i32_0 : i32, i32
  }
  func.func @transform_8(%arg0: i32, %arg1: i32) -> (i32, i32) {
    %c0_i32 = arith.constant 0 : i32
    %c0_i32_0 = arith.constant 0 : i32
    %c0_i32_1 = arith.constant 0 : i32
    return %c0_i32, %c0_i32_0 : i32, i32
  }
  func.func @transform_9(%arg0: i32, %arg1: i32) -> (i32, i32) {
    %c0_i32 = arith.constant 0 : i32
    %c0_i32_0 = arith.constant 0 : i32
    %c0_i32_1 = arith.constant 0 : i32
    return %c0_i32, %c0_i32_0 : i32, i32
  }
  func.func @transform_10(%arg0: i32, %arg1: i32) -> (i32, i32) {
    %c0_i32 = arith.constant 0 : i32
    %c0_i32_0 = arith.constant 0 : i32
    %c0_i32_1 = arith.constant 0 : i32
    return %c0_i32, %c0_i32_0 : i32, i32
  }
  func.func @transform_11(%arg0: i32, %arg1: i32) -> (i32, i32) {
    %c0_i32 = arith.constant 0 : i32
    %c0_i32_0 = arith.constant 0 : i32
    %c0_i32_1 = arith.constant 0 : i32
    return %c0_i32, %c0_i32_0 : i32, i32
  }
  func.func @transform_12(%arg0: i32, %arg1: i32) -> (i32, i32) {
    %c0_i32 = arith.constant 0 : i32
    %c0_i32_0 = arith.constant 0 : i32
    %c0_i32_1 = arith.constant 0 : i32
    return %c0_i32, %c0_i32_0 : i32, i32
  }
  func.func @transform_13(%arg0: i32, %arg1: i32) -> (i32, i32) {
    %c0_i32 = arith.constant 0 : i32
    %c0_i32_0 = arith.constant 0 : i32
    %c0_i32_1 = arith.constant 0 : i32
    return %c0_i32, %c0_i32_0 : i32, i32
  }
  func.func @transform_14(%arg0: i32, %arg1: i32) -> (i32, i32) {
    %c0_i32 = arith.constant 0 : i32
    %c0_i32_0 = arith.constant 0 : i32
    %c0_i32_1 = arith.constant 0 : i32
    return %c0_i32, %c0_i32_0 : i32, i32
  }
  func.func @transform_15(%arg0: i32, %arg1: i32) -> (i32, i32) {
    %c0_i32 = arith.constant 0 : i32
    %c0_i32_0 = arith.constant 0 : i32
    %c0_i32_1 = arith.constant 0 : i32
    return %c0_i32, %c0_i32_0 : i32, i32
  }
  func.func @transform_16(%arg0: i32, %arg1: i32) -> (i32, i32) {
    %c0_i32 = arith.constant 0 : i32
    %c0_i32_0 = arith.constant 0 : i32
    %c0_i32_1 = arith.constant 0 : i32
    return %c0_i32, %c0_i32_0 : i32, i32
  }
  func.func @transform_17(%arg0: i32, %arg1: i32) -> (i32, i32) {
    %c0_i32 = arith.constant 0 : i32
    %c0_i32_0 = arith.constant 0 : i32
    %c0_i32_1 = arith.constant 0 : i32
    return %c0_i32, %c0_i32_0 : i32, i32
  }
  func.func @transform_18(%arg0: i32, %arg1: i32) -> (i32, i32) {
    %c0_i32 = arith.constant 0 : i32
    %c0_i32_0 = arith.constant 0 : i32
    %c0_i32_1 = arith.constant 0 : i32
    return %c0_i32, %c0_i32_0 : i32, i32
  }
  func.func @transform_19(%arg0: i32, %arg1: i32) -> (i32, i32, i32) {
    %c0_i32 = arith.constant 0 : i32
    %c0_i32_0 = arith.constant 0 : i32
    return %arg0, %c0_i32, %arg1 : i32, i32, i32
  }
}

</mosaic_0001>

<llo_original>
// kernel: fixed_duration_regulator.1
$region0: #{fixed_duration_regulator.1}
  #allocation0 [shape = 'u32[]', space=smem, size = 0x4, offset = 0x4, fixed_abs, tag = 'smem constant byte address 0x4 - core index']
  #allocation1 [shape = 'u32[144,128]{1,0:T(1,128)}', space=vmem, size = 0x12000, scoped, tag = 'internal scratch']
  %s0 = inlined_call_operand.vmem [shape: f32[2,8,384], index: 0, kind: input, shape index: {}]
  %s1 = inlined_call_operand.vmem [shape: f32[2,1,128], index: 1, kind: input, shape index: {}]
  %s2 = inlined_call_operand.hbm [shape: bf16[384,384], index: 2, kind: input, shape index: {}]
  %s3 = inlined_call_operand.hbm [shape: bf16[128,384], index: 3, kind: input, shape index: {}]
  %s4 = inlined_call_operand.vmem [shape: f32[1,384], index: 4, kind: input, shape index: {}]
  %s5 = inlined_call_operand.vmem [shape: f32[1,256], index: 5, kind: input, shape index: {}]
  %s6 = inlined_call_operand.vmem [shape: f32[1,256], index: 6, kind: input, shape index: {}]
  %s7 = inlined_call_operand.vmem [shape: f32[1,128], index: 7, kind: input, shape index: {}]
  %s8 = inlined_call_operand.vmem [shape: f32[1,128], index: 8, kind: input, shape index: {}]
  %s9 = inlined_call_operand.hbm [shape: bf16[256,256], index: 9, kind: input, shape index: {}]
  %s10 = inlined_call_operand.vmem [shape: f32[1,256], index: 10, kind: input, shape index: {}]
  %s11 = inlined_call_operand.vmem [shape: f32[1,256], index: 11, kind: input, shape index: {}]
  %s12 = inlined_call_operand.vmem [shape: f32[1,256], index: 12, kind: input, shape index: {}]
  %s13 = inlined_call_operand.hbm [shape: bf16[256,128], index: 13, kind: input, shape index: {}]
  %s14 = inlined_call_operand.vmem [shape: f32[1,128], index: 14, kind: input, shape index: {}]
  %s15 = inlined_call_operand.hbm [shape: bf16[128,128], index: 15, kind: input, shape index: {}]
  %s16 = inlined_call_operand.vmem [shape: f32[1,128], index: 16, kind: input, shape index: {}]
  %s17 = inlined_call_operand.vmem [shape: bf16[2,256], index: 17, kind: input, shape index: {}]
  %s18 = inlined_call_operand.vmem [shape: f32[2,1], index: 18, kind: input, shape index: {}]
  %s19 = inlined_call_operand.vmem [shape: f32[2,2,8], index: 19, kind: output, shape index: {}]
  %s20 = sld [smem:[#allocation0]]
  $region129: #{fixed_duration_regulator.1} parent=0
    _
  %s22 = ssub.s32 1, %s20
  %s23 = scalar_select 0, %s22, %s20
  $region1: #{fixed_duration_regulator.1} parent=0
    #allocation2 [shape = 'u8[294912]{0}', space=vmem, size = 0x48000, scoped, tag = 'input window, operand 2, single buffered']
    #allocation3 [shape = 's32[2]{0}', space=sflag, size = 0x8, scoped, tag = 'scoped memory for fixed_duration_regulator.1']
    #allocation4 [shape = 'u8[98304]{0}', space=vmem, size = 0x18000, scoped, tag = 'input window, operand 3, single buffered']
    #allocation5 [shape = 's32[1]{0}', space=sflag, size = 0x4, scoped, tag = 'scoped memory for fixed_duration_regulator.1']
    #allocation6 [shape = 'u8[131072]{0}', space=vmem, size = 0x20000, scoped, tag = 'input window, operand 9, single buffered']
    #allocation7 [shape = 'u8[65536]{0}', space=vmem, size = 0x10000, scoped, tag = 'input window, operand 13, single buffered']
    #allocation8 [shape = 's32[1]{0}', space=sflag, size = 0x4, scoped, tag = 'scoped memory for fixed_duration_regulator.1']
    #allocation9 [shape = 'u8[32768]{0}', space=vmem, size = 0x8000, scoped, tag = 'input window, operand 15, single buffered']
    %24 = vsyncpa [#allocation3], 0
    %25 = vsyncpa [#allocation5], 0
    %26 = vsyncpa [#allocation8], 0
    loop: start=0, step=1, limit=4
    $region2: #{fixed_duration_regulator.1} parent=1 // loop_pre_header
      _
    $region3: #{fixed_duration_regulator.1} parent=1 // loop_header
      %s28 = sphi 0, %s32
      %p29 = scmp.ge.s32.totalorder %s28, 4
      %s35 = sphi 0, %s47
      %s36 = sphi 0, %s43
      %s37 = sphi 0, %s35
      %s38 = sphi 0, %s36
      %s39 = sphi 0, %s37
      %s40 = sphi 0, %s38
      %s52 = sphi 0, %s54
      %s55 = sphi 0, %s52
      %s56 = sphi 0, %s55
      %s72 = sphi 0, %s56
      %s78 = sphi 0, %s80
      %s81 = sphi 0, %s78
      %s82 = sphi 0, %s81
      %s98 = sphi 0, %s82
      %s102 = sphi 0, %s102
      %s104 = sphi 0, %s102
      %s105 = sphi 0, %s104
      %s119 = sphi 0, %s105
      %s123 = sphi 0, %s123
      %s125 = sphi 0, %s123
      %s126 = sphi 0, %s125
      %s140 = sphi 0, %s126
      %s144 = sphi 0, %s144
      %s146 = sphi 0, %s144
      %s147 = sphi 0, %s146
      %s161 = sphi 0, %s147
      %s165 = sphi 0, %s165
      %s167 = sphi 0, %s165
      %s168 = sphi 0, %s167
      %s182 = sphi 0, %s168
      %s186 = sphi 0, %s186
      %s188 = sphi 0, %s186
      %s189 = sphi 0, %s188
      %s203 = sphi 0, %s189
      %s207 = sphi 0, %s207
      %s209 = sphi 0, %s207
      %s210 = sphi 0, %s209
      %s224 = sphi 0, %s210
      %s228 = sphi 0, %s228
      %s230 = sphi 0, %s228
      %s231 = sphi 0, %s230
      %s245 = sphi 0, %s231
      %s249 = sphi 0, %s249
      %s251 = sphi 0, %s249
      %s252 = sphi 0, %s251
      %s266 = sphi 0, %s252
      %s270 = sphi 0, %s270
      %s272 = sphi 0, %s270
      %s273 = sphi 0, %s272
      %s287 = sphi 0, %s273
      %s291 = sphi 0, %s291
      %s293 = sphi 0, %s291
      %s294 = sphi 0, %s293
      %s308 = sphi 0, %s294
      %s312 = sphi 0, %s312
      %s314 = sphi 0, %s312
      %s315 = sphi 0, %s314
      %s329 = sphi 0, %s315
      %s333 = sphi 0, %s333
      %s335 = sphi 0, %s333
      %s336 = sphi 0, %s335
      %s350 = sphi 0, %s336
      %s354 = sphi 0, %s354
      %s356 = sphi 0, %s354
      %s357 = sphi 0, %s356
      %s371 = sphi 0, %s357
      %s375 = sphi 0, %s375
      %s377 = sphi 0, %s375
      %s378 = sphi 0, %s377
      %s392 = sphi 0, %s378
      %s396 = sphi 0, %s396
      %s398 = sphi 0, %s396
      %s399 = sphi 0, %s398
      %s413 = sphi 0, %s399
      %s417 = sphi 0, %s417
      %s419 = sphi 0, %s417
      %s420 = sphi 0, %s419
      %s434 = sphi 0, %s420
      %s438 = sphi 0, %s438
      %s440 = sphi 0, %s438
      %s441 = sphi 0, %s440
      %s455 = sphi 0, %s441
      %s463 = sphi 0, %s465
      %s466 = sphi 0, %s463
      %s467 = sphi 0, %s466
      %s483 = sphi 0, %s467
    $region4: #{fixed_duration_regulator.1} parent=1 // loop_header_branch
      %31 = sbr.rel (%p29) target = $region8
    $region5: #{fixed_duration_regulator.1} parent=1 // loop_body
      %s33 = ssub.s32 %s28, 1
      %s34 = ssub.s32 %s28, 2
      %s41 = sadd.s32 1, %s36
      %p42 = scmp.ge.s32.totalorder %s41, 1
      %s43 = scalar_select %p42, 0, %s41
      %s44 = sadd.s32 1, %s35
      %s45 = scalar_select %p42, %s44, %s35
      %p46 = scmp.ge.s32.totalorder %s45, 2
      %s47 = scalar_select %p46, 0, %s45
      %s48 = ssub.s32 %s35, %s47
      %s49 = ssub.s32 %s36, %s43
      %s50 = sor.u32 %s48, %s49
      %p51 = scmp.eq.s32.totalorder %s50, 0
      %s53 = sadd.s32 %s52, 1
      %s54 = scalar_select %p51, %s52, %s53
      %p57 = pneg %p51
      %p58 = scmp.eq.s32.totalorder %s28, 1
      %p59 = por %p57, %p58
      %p60 = scmp.ne.s32.totalorder %s52, %s55
      %p61 = scmp.eq.s32.totalorder %s28, 0
      %p62 = por %p60, %p61
      %p63 = scmp.ne.s32.totalorder %s52, %s55
      %p64 = scmp.eq.s32.totalorder %s33, 1
      %p65 = por %p63, %p64
      %p66 = scmp.ne.s32.totalorder %s55, %s56
      %p67 = scmp.eq.s32.totalorder %s33, 0
      %p68 = por %p66, %p67
      %p69 = scmp.ne.s32.totalorder %s55, %s56
      %p70 = scmp.eq.s32.totalorder %s34, 1
      %p71 = por %p69, %p70
      %p73 = scmp.ne.s32.totalorder %s56, %s72
      %p74 = scmp.eq.s32.totalorder %s34, 0
      %p75 = por %p73, %p74
      %s76 = ssub.s32 %s35, %s47
      %p77 = scmp.eq.s32.totalorder %s76, 0
      %s79 = sadd.s32 %s78, 1
      %s80 = scalar_select %p77, %s78, %s79
      %p83 = pneg %p77
      %p84 = scmp.eq.s32.totalorder %s28, 1
      %p85 = por %p83, %p84
      %p86 = scmp.ne.s32.totalorder %s78, %s81
      %p87 = scmp.eq.s32.totalorder %s28, 0
      %p88 = por %p86, %p87
      %p89 = scmp.ne.s32.totalorder %s78, %s81
      %p90 = scmp.eq.s32.totalorder %s33, 1
      %p91 = por %p89, %p90
      %p92 = scmp.ne.s32.totalorder %s81, %s82
      %p93 = scmp.eq.s32.totalorder %s33, 0
      %p94 = por %p92, %p93
      %p95 = scmp.ne.s32.totalorder %s81, %s82
      %p96 = scmp.eq.s32.totalorder %s34, 1
      %p97 = por %p95, %p96
      %p99 = scmp.ne.s32.totalorder %s82, %s98
      %p100 = scmp.eq.s32.totalorder %s34, 0
      %p101 = por %p99, %p100
      %s103 = sadd.s32 %s102, 1
      %p106 = scmp.eq.s32.totalorder %s28, 1
      %p107 = scmp.ne.s32.totalorder %s102, %s104
      %p108 = scmp.eq.s32.totalorder %s28, 0
      %p109 = por %p107, %p108
      %p110 = scmp.ne.s32.totalorder %s102, %s104
      %p111 = scmp.eq.s32.totalorder %s33, 1
      %p112 = por %p110, %p111
      %p113 = scmp.ne.s32.totalorder %s104, %s105
      %p114 = scmp.eq.s32.totalorder %s33, 0
      %p115 = por %p113, %p114
      %p116 = scmp.ne.s32.totalorder %s104, %s105
      %p117 = scmp.eq.s32.totalorder %s34, 1
      %p118 = por %p116, %p117
      %p120 = scmp.ne.s32.totalorder %s105, %s119
      %p121 = scmp.eq.s32.totalorder %s34, 0
      %p122 = por %p120, %p121
      %s124 = sadd.s32 %s123, 1
      %p127 = scmp.eq.s32.totalorder %s28, 1
      %p128 = scmp.ne.s32.totalorder %s123, %s125
      %p129 = scmp.eq.s32.totalorder %s28, 0
      %p130 = por %p128, %p129
      %p131 = scmp.ne.s32.totalorder %s123, %s125
      %p132 = scmp.eq.s32.totalorder %s33, 1
      %p133 = por %p131, %p132
      %p134 = scmp.ne.s32.totalorder %s125, %s126
      %p135 = scmp.eq.s32.totalorder %s33, 0
      %p136 = por %p134, %p135
      %p137 = scmp.ne.s32.totalorder %s125, %s126
      %p138 = scmp.eq.s32.totalorder %s34, 1
      %p139 = por %p137, %p138
      %p141 = scmp.ne.s32.totalorder %s126, %s140
      %p142 = scmp.eq.s32.totalorder %s34, 0
      %p143 = por %p141, %p142
      %s145 = sadd.s32 %s144, 1
      %p148 = scmp.eq.s32.totalorder %s28, 1
      %p149 = scmp.ne.s32.totalorder %s144, %s146
      %p150 = scmp.eq.s32.totalorder %s28, 0
      %p151 = por %p149, %p150
      %p152 = scmp.ne.s32.totalorder %s144, %s146
      %p153 = scmp.eq.s32.totalorder %s33, 1
      %p154 = por %p152, %p153
      %p155 = scmp.ne.s32.totalorder %s146, %s147
      %p156 = scmp.eq.s32.totalorder %s33, 0
      %p157 = por %p155, %p156
      %p158 = scmp.ne.s32.totalorder %s146, %s147
      %p159 = scmp.eq.s32.totalorder %s34, 1
      %p160 = por %p158, %p159
      %p162 = scmp.ne.s32.totalorder %s147, %s161
      %p163 = scmp.eq.s32.totalorder %s34, 0
      %p164 = por %p162, %p163
      %s166 = sadd.s32 %s165, 1
      %p169 = scmp.eq.s32.totalorder %s28, 1
      %p170 = scmp.ne.s32.totalorder %s165, %s167
      %p171 = scmp.eq.s32.totalorder %s28, 0
      %p172 = por %p170, %p171
      %p173 = scmp.ne.s32.totalorder %s165, %s167
      %p174 = scmp.eq.s32.totalorder %s33, 1
      %p175 = por %p173, %p174
      %p176 = scmp.ne.s32.totalorder %s167, %s168
      %p177 = scmp.eq.s32.totalorder %s33, 0
      %p178 = por %p176, %p177
      %p179 = scmp.ne.s32.totalorder %s167, %s168
      %p180 = scmp.eq.s32.totalorder %s34, 1
      %p181 = por %p179, %p180
      %p183 = scmp.ne.s32.totalorder %s168, %s182
      %p184 = scmp.eq.s32.totalorder %s34, 0
      %p185 = por %p183, %p184
      %s187 = sadd.s32 %s186, 1
      %p190 = scmp.eq.s32.totalorder %s28, 1
      %p191 = scmp.ne.s32.totalorder %s186, %s188
      %p192 = scmp.eq.s32.totalorder %s28, 0
      %p193 = por %p191, %p192
      %p194 = scmp.ne.s32.totalorder %s186, %s188
      %p195 = scmp.eq.s32.totalorder %s33, 1
      %p196 = por %p194, %p195
      %p197 = scmp.ne.s32.totalorder %s188, %s189
      %p198 = scmp.eq.s32.totalorder %s33, 0
      %p199 = por %p197, %p198
      %p200 = scmp.ne.s32.totalorder %s188, %s189
      %p201 = scmp.eq.s32.totalorder %s34, 1
      %p202 = por %p200, %p201
      %p204 = scmp.ne.s32.totalorder %s189, %s203
      %p205 = scmp.eq.s32.totalorder %s34, 0
      %p206 = por %p204, %p205
      %s208 = sadd.s32 %s207, 1
      %p211 = scmp.eq.s32.totalorder %s28, 1
      %p212 = scmp.ne.s32.totalorder %s207, %s209
      %p213 = scmp.eq.s32.totalorder %s28, 0
      %p214 = por %p212, %p213
      %p215 = scmp.ne.s32.totalorder %s207, %s209
      %p216 = scmp.eq.s32.totalorder %s33, 1
      %p217 = por %p215, %p216
      %p218 = scmp.ne.s32.totalorder %s209, %s210
      %p219 = scmp.eq.s32.totalorder %s33, 0
      %p220 = por %p218, %p219
      %p221 = scmp.ne.s32.totalorder %s209, %s210
      %p222 = scmp.eq.s32.totalorder %s34, 1
      %p223 = por %p221, %p222
      %p225 = scmp.ne.s32.totalorder %s210, %s224
      %p226 = scmp.eq.s32.totalorder %s34, 0
      %p227 = por %p225, %p226
      %s229 = sadd.s32 %s228, 1
      %p232 = scmp.eq.s32.totalorder %s28, 1
      %p233 = scmp.ne.s32.totalorder %s228, %s230
      %p234 = scmp.eq.s32.totalorder %s28, 0
      %p235 = por %p233, %p234
      %p236 = scmp.ne.s32.totalorder %s228, %s230
      %p237 = scmp.eq.s32.totalorder %s33, 1
      %p238 = por %p236, %p237
      %p239 = scmp.ne.s32.totalorder %s230, %s231
      %p240 = scmp.eq.s32.totalorder %s33, 0
      %p241 = por %p239, %p240
      %p242 = scmp.ne.s32.totalorder %s230, %s231
      %p243 = scmp.eq.s32.totalorder %s34, 1
      %p244 = por %p242, %p243
      %p246 = scmp.ne.s32.totalorder %s231, %s245
      %p247 = scmp.eq.s32.totalorder %s34, 0
      %p248 = por %p246, %p247
      %s250 = sadd.s32 %s249, 1
      %p253 = scmp.eq.s32.totalorder %s28, 1
      %p254 = scmp.ne.s32.totalorder %s249, %s251
      %p255 = scmp.eq.s32.totalorder %s28, 0
      %p256 = por %p254, %p255
      %p257 = scmp.ne.s32.totalorder %s249, %s251
      %p258 = scmp.eq.s32.totalorder %s33, 1
      %p259 = por %p257, %p258
      %p260 = scmp.ne.s32.totalorder %s251, %s252
      %p261 = scmp.eq.s32.totalorder %s33, 0
      %p262 = por %p260, %p261
      %p263 = scmp.ne.s32.totalorder %s251, %s252
      %p264 = scmp.eq.s32.totalorder %s34, 1
      %p265 = por %p263, %p264
      %p267 = scmp.ne.s32.totalorder %s252, %s266
      %p268 = scmp.eq.s32.totalorder %s34, 0
      %p269 = por %p267, %p268
      %s271 = sadd.s32 %s270, 1
      %p274 = scmp.eq.s32.totalorder %s28, 1
      %p275 = scmp.ne.s32.totalorder %s270, %s272
      %p276 = scmp.eq.s32.totalorder %s28, 0
      %p277 = por %p275, %p276
      %p278 = scmp.ne.s32.totalorder %s270, %s272
      %p279 = scmp.eq.s32.totalorder %s33, 1
      %p280 = por %p278, %p279
      %p281 = scmp.ne.s32.totalorder %s272, %s273
      %p282 = scmp.eq.s32.totalorder %s33, 0
      %p283 = por %p281, %p282
      %p284 = scmp.ne.s32.totalorder %s272, %s273
      %p285 = scmp.eq.s32.totalorder %s34, 1
      %p286 = por %p284, %p285
      %p288 = scmp.ne.s32.totalorder %s273, %s287
      %p289 = scmp.eq.s32.totalorder %s34, 0
      %p290 = por %p288, %p289
      %s292 = sadd.s32 %s291, 1
      %p295 = scmp.eq.s32.totalorder %s28, 1
      %p296 = scmp.ne.s32.totalorder %s291, %s293
      %p297 = scmp.eq.s32.totalorder %s28, 0
      %p298 = por %p296, %p297
      %p299 = scmp.ne.s32.totalorder %s291, %s293
      %p300 = scmp.eq.s32.totalorder %s33, 1
      %p301 = por %p299, %p300
      %p302 = scmp.ne.s32.totalorder %s293, %s294
      %p303 = scmp.eq.s32.totalorder %s33, 0
      %p304 = por %p302, %p303
      %p305 = scmp.ne.s32.totalorder %s293, %s294
      %p306 = scmp.eq.s32.totalorder %s34, 1
      %p307 = por %p305, %p306
      %p309 = scmp.ne.s32.totalorder %s294, %s308
      %p310 = scmp.eq.s32.totalorder %s34, 0
      %p311 = por %p309, %p310
      %s313 = sadd.s32 %s312, 1
      %p316 = scmp.eq.s32.totalorder %s28, 1
      %p317 = scmp.ne.s32.totalorder %s312, %s314
      %p318 = scmp.eq.s32.totalorder %s28, 0
      %p319 = por %p317, %p318
      %p320 = scmp.ne.s32.totalorder %s312, %s314
      %p321 = scmp.eq.s32.totalorder %s33, 1
      %p322 = por %p320, %p321
      %p323 = scmp.ne.s32.totalorder %s314, %s315
      %p324 = scmp.eq.s32.totalorder %s33, 0
      %p325 = por %p323, %p324
      %p326 = scmp.ne.s32.totalorder %s314, %s315
      %p327 = scmp.eq.s32.totalorder %s34, 1
      %p328 = por %p326, %p327
      %p330 = scmp.ne.s32.totalorder %s315, %s329
      %p331 = scmp.eq.s32.totalorder %s34, 0
      %p332 = por %p330, %p331
      %s334 = sadd.s32 %s333, 1
      %p337 = scmp.eq.s32.totalorder %s28, 1
      %p338 = scmp.ne.s32.totalorder %s333, %s335
      %p339 = scmp.eq.s32.totalorder %s28, 0
      %p340 = por %p338, %p339
      %p341 = scmp.ne.s32.totalorder %s333, %s335
      %p342 = scmp.eq.s32.totalorder %s33, 1
      %p343 = por %p341, %p342
      %p344 = scmp.ne.s32.totalorder %s335, %s336
      %p345 = scmp.eq.s32.totalorder %s33, 0
      %p346 = por %p344, %p345
      %p347 = scmp.ne.s32.totalorder %s335, %s336
      %p348 = scmp.eq.s32.totalorder %s34, 1
      %p349 = por %p347, %p348
      %p351 = scmp.ne.s32.totalorder %s336, %s350
      %p352 = scmp.eq.s32.totalorder %s34, 0
      %p353 = por %p351, %p352
      %s355 = sadd.s32 %s354, 1
      %p358 = scmp.eq.s32.totalorder %s28, 1
      %p359 = scmp.ne.s32.totalorder %s354, %s356
      %p360 = scmp.eq.s32.totalorder %s28, 0
      %p361 = por %p359, %p360
      %p362 = scmp.ne.s32.totalorder %s354, %s356
      %p363 = scmp.eq.s32.totalorder %s33, 1
      %p364 = por %p362, %p363
      %p365 = scmp.ne.s32.totalorder %s356, %s357
      %p366 = scmp.eq.s32.totalorder %s33, 0
      %p367 = por %p365, %p366
      %p368 = scmp.ne.s32.totalorder %s356, %s357
      %p369 = scmp.eq.s32.totalorder %s34, 1
      %p370 = por %p368, %p369
      %p372 = scmp.ne.s32.totalorder %s357, %s371
      %p373 = scmp.eq.s32.totalorder %s34, 0
      %p374 = por %p372, %p373
      %s376 = sadd.s32 %s375, 1
      %p379 = scmp.eq.s32.totalorder %s28, 1
      %p380 = scmp.ne.s32.totalorder %s375, %s377
      %p381 = scmp.eq.s32.totalorder %s28, 0
      %p382 = por %p380, %p381
      %p383 = scmp.ne.s32.totalorder %s375, %s377
      %p384 = scmp.eq.s32.totalorder %s33, 1
      %p385 = por %p383, %p384
      %p386 = scmp.ne.s32.totalorder %s377, %s378
      %p387 = scmp.eq.s32.totalorder %s33, 0
      %p388 = por %p386, %p387
      %p389 = scmp.ne.s32.totalorder %s377, %s378
      %p390 = scmp.eq.s32.totalorder %s34, 1
      %p391 = por %p389, %p390
      %p393 = scmp.ne.s32.totalorder %s378, %s392
      %p394 = scmp.eq.s32.totalorder %s34, 0
      %p395 = por %p393, %p394
      %s397 = sadd.s32 %s396, 1
      %p400 = scmp.eq.s32.totalorder %s28, 1
      %p401 = scmp.ne.s32.totalorder %s396, %s398
      %p402 = scmp.eq.s32.totalorder %s28, 0
      %p403 = por %p401, %p402
      %p404 = scmp.ne.s32.totalorder %s396, %s398
      %p405 = scmp.eq.s32.totalorder %s33, 1
      %p406 = por %p404, %p405
      %p407 = scmp.ne.s32.totalorder %s398, %s399
      %p408 = scmp.eq.s32.totalorder %s33, 0
      %p409 = por %p407, %p408
      %p410 = scmp.ne.s32.totalorder %s398, %s399
      %p411 = scmp.eq.s32.totalorder %s34, 1
      %p412 = por %p410, %p411
      %p414 = scmp.ne.s32.totalorder %s399, %s413
      %p415 = scmp.eq.s32.totalorder %s34, 0
      %p416 = por %p414, %p415
      %s418 = sadd.s32 %s417, 1
      %p421 = scmp.eq.s32.totalorder %s28, 1
      %p422 = scmp.ne.s32.totalorder %s417, %s419
      %p423 = scmp.eq.s32.totalorder %s28, 0
      %p424 = por %p422, %p423
      %p425 = scmp.ne.s32.totalorder %s417, %s419
      %p426 = scmp.eq.s32.totalorder %s33, 1
      %p427 = por %p425, %p426
      %p428 = scmp.ne.s32.totalorder %s419, %s420
      %p429 = scmp.eq.s32.totalorder %s33, 0
      %p430 = por %p428, %p429
      %p431 = scmp.ne.s32.totalorder %s419, %s420
      %p432 = scmp.eq.s32.totalorder %s34, 1
      %p433 = por %p431, %p432
      %p435 = scmp.ne.s32.totalorder %s420, %s434
      %p436 = scmp.eq.s32.totalorder %s34, 0
      %p437 = por %p435, %p436
      %s439 = sadd.s32 %s438, 1
      %p442 = scmp.eq.s32.totalorder %s28, 1
      %p443 = scmp.ne.s32.totalorder %s438, %s440
      %p444 = scmp.eq.s32.totalorder %s28, 0
      %p445 = por %p443, %p444
      %p446 = scmp.ne.s32.totalorder %s438, %s440
      %p447 = scmp.eq.s32.totalorder %s33, 1
      %p448 = por %p446, %p447
      %p449 = scmp.ne.s32.totalorder %s440, %s441
      %p450 = scmp.eq.s32.totalorder %s33, 0
      %p451 = por %p449, %p450
      %p452 = scmp.ne.s32.totalorder %s440, %s441
      %p453 = scmp.eq.s32.totalorder %s34, 1
      %p454 = por %p452, %p453
      %p456 = scmp.ne.s32.totalorder %s441, %s455
      %p457 = scmp.eq.s32.totalorder %s34, 0
      %p458 = por %p456, %p457
      %s459 = ssub.s32 %s35, %s47
      %s460 = ssub.s32 %s36, %s43
      %s461 = sor.u32 %s459, %s460
      %p462 = scmp.eq.s32.totalorder %s461, 0
      %s464 = sadd.s32 %s463, 1
      %s465 = scalar_select %p462, %s463, %s464
      %p468 = pneg %p462
      %p469 = scmp.eq.s32.totalorder %s28, 1
      %p470 = por %p468, %p469
      %p471 = scmp.ne.s32.totalorder %s463, %s466
      %p472 = scmp.eq.s32.totalorder %s28, 0
      %p473 = por %p471, %p472
      %p474 = scmp.ne.s32.totalorder %s463, %s466
      %p475 = scmp.eq.s32.totalorder %s33, 1
      %p476 = por %p474, %p475
      %p477 = scmp.ne.s32.totalorder %s466, %s467
      %p478 = scmp.eq.s32.totalorder %s33, 0
      %p479 = por %p477, %p478
      %p480 = scmp.ne.s32.totalorder %s466, %s467
      %p481 = scmp.eq.s32.totalorder %s34, 1
      %p482 = por %p480, %p481
      %p484 = scmp.ne.s32.totalorder %s467, %s483
      %p485 = scmp.eq.s32.totalorder %s34, 0
      %p486 = por %p484, %p485
      %p487 = scmp.le.s32.totalorder 1, %s28
      %p488 = scmp.lt.s32.totalorder %s28, 3
      %p489 = pnand %p487, %p488
      %p490 = pneg %p489
      // Predicated region
      $region9: #{fixed_duration_regulator.1} parent=5 // pred_check
        _
      $region10: #{fixed_duration_regulator.1} parent=5 // pred_check_branch
        %492 = sbr.rel (%p489) target = $region12
      $region11: #{fixed_duration_regulator.1} parent=5 // pred_region
        %s493 = ssub.s32 %s28, 1
        // Predicated region
        $region13: #{fixed_duration_regulator.1} parent=11 // pred_check
          %p494 = pneg %p115
        $region14: #{fixed_duration_regulator.1} parent=11 // pred_check_branch
          %496 = sbr.rel (%p494) target = $region16
        $region15: #{fixed_duration_regulator.1} parent=11 // pred_region
          %s498 = ssub.s32 9216, 9216
          %499 = vsyncadd [#allocation3], %s498
          %s500 = sshll.u32 [#allocation2], 4
          %s501 = int_to_ptr.vmem [resolvable:$true] %s500
          %506 = dma.hbm_to_vmem [thread:$0]  %s2, 9216, %s501, [#allocation3], 192, 192, 12
        $region16: #{fixed_duration_regulator.1} parent=11 // pred_fallthru
          _
        // Predicated region
        $region17: #{fixed_duration_regulator.1} parent=11 // pred_check
          %p507 = pneg %p136
        $region18: #{fixed_duration_regulator.1} parent=11 // pred_check_branch
          %509 = sbr.rel (%p507) target = $region20
        $region19: #{fixed_duration_regulator.1} parent=11 // pred_region
          %s511 = ssub.s32 3072, 3072
          %512 = vsyncadd [#allocation5], %s511
          %s513 = sshll.u32 [#allocation4], 4
          %s514 = int_to_ptr.vmem [resolvable:$true] %s513
          %519 = dma.hbm_to_vmem [thread:$0]  %s3, 3072, %s514, [#allocation5], 192, 192, 12
        $region20: #{fixed_duration_regulator.1} parent=11 // pred_fallthru
          _
        // Predicated region
        $region21: #{fixed_duration_regulator.1} parent=11 // pred_check
          %p520 = pneg %p157
        $region22: #{fixed_duration_regulator.1} parent=11 // pred_check_branch
          %522 = sbr.rel (%p520) target = $region24
        $region23: #{fixed_duration_regulator.1} parent=11 // pred_region
          _
        $region24: #{fixed_duration_regulator.1} parent=11 // pred_fallthru
          _
        // Predicated region
        $region25: #{fixed_duration_regulator.1} parent=11 // pred_check
          %p523 = pneg %p178
        $region26: #{fixed_duration_regulator.1} parent=11 // pred_check_branch
          %525 = sbr.rel (%p523) target = $region28
        $region27: #{fixed_duration_regulator.1} parent=11 // pred_region
          _
        $region28: #{fixed_duration_regulator.1} parent=11 // pred_fallthru
          _
        // Predicated region
        $region29: #{fixed_duration_regulator.1} parent=11 // pred_check
          %p526 = pneg %p199
        $region30: #{fixed_duration_regulator.1} parent=11 // pred_check_branch
          %528 = sbr.rel (%p526) target = $region32
        $region31: #{fixed_duration_regulator.1} parent=11 // pred_region
          _
        $region32: #{fixed_duration_regulator.1} parent=11 // pred_fallthru
          _
        // Predicated region
        $region33: #{fixed_duration_regulator.1} parent=11 // pred_check
          %p529 = pneg %p220
        $region34: #{fixed_duration_regulator.1} parent=11 // pred_check_branch
          %531 = sbr.rel (%p529) target = $region36
        $region35: #{fixed_duration_regulator.1} parent=11 // pred_region
          _
        $region36: #{fixed_duration_regulator.1} parent=11 // pred_fallthru
          _
        // Predicated region
        $region37: #{fixed_duration_regulator.1} parent=11 // pred_check
          %p532 = pneg %p241
        $region38: #{fixed_duration_regulator.1} parent=11 // pred_check_branch
          %534 = sbr.rel (%p532) target = $region40
        $region39: #{fixed_duration_regulator.1} parent=11 // pred_region
          _
        $region40: #{fixed_duration_regulator.1} parent=11 // pred_fallthru
          _
        // Predicated region
        $region41: #{fixed_duration_regulator.1} parent=11 // pred_check
          %p535 = pneg %p262
        $region42: #{fixed_duration_regulator.1} parent=11 // pred_check_branch
          %537 = sbr.rel (%p535) target = $region44
        $region43: #{fixed_duration_regulator.1} parent=11 // pred_region
          %s539 = ssub.s32 4096, 4096
          %540 = vsyncadd [#allocation5], %s539
          %s541 = sshll.u32 [#allocation6], 4
          %s542 = int_to_ptr.vmem [resolvable:$true] %s541
          %547 = dma.hbm_to_vmem [thread:$0]  %s9, 4096, %s542, [#allocation5], 128, 128, 8
        $region44: #{fixed_duration_regulator.1} parent=11 // pred_fallthru
          _
        // Predicated region
        $region45: #{fixed_duration_regulator.1} parent=11 // pred_check
          %p548 = pneg %p283
        $region46: #{fixed_duration_regulator.1} parent=11 // pred_check_branch
          %550 = sbr.rel (%p548) target = $region48
        $region47: #{fixed_duration_regulator.1} parent=11 // pred_region
          _
        $region48: #{fixed_duration_regulator.1} parent=11 // pred_fallthru
          _
        // Predicated region
        $region49: #{fixed_duration_regulator.1} parent=11 // pred_check
          %p551 = pneg %p304
        $region50: #{fixed_duration_regulator.1} parent=11 // pred_check_branch
          %553 = sbr.rel (%p551) target = $region52
        $region51: #{fixed_duration_regulator.1} parent=11 // pred_region
          _
        $region52: #{fixed_duration_regulator.1} parent=11 // pred_fallthru
          _
        // Predicated region
        $region53: #{fixed_duration_regulator.1} parent=11 // pred_check
          %p554 = pneg %p325
        $region54: #{fixed_duration_regulator.1} parent=11 // pred_check_branch
          %556 = sbr.rel (%p554) target = $region56
        $region55: #{fixed_duration_regulator.1} parent=11 // pred_region
          _
        $region56: #{fixed_duration_regulator.1} parent=11 // pred_fallthru
          _
        // Predicated region
        $region57: #{fixed_duration_regulator.1} parent=11 // pred_check
          %p557 = pneg %p346
        $region58: #{fixed_duration_regulator.1} parent=11 // pred_check_branch
          %559 = sbr.rel (%p557) target = $region60
        $region59: #{fixed_duration_regulator.1} parent=11 // pred_region
          %s561 = ssub.s32 2048, 2048
          %562 = vsyncadd [#allocation8], %s561
          %s563 = sshll.u32 [#allocation7], 4
          %s564 = int_to_ptr.vmem [resolvable:$true] %s563
          %569 = dma.hbm_to_vmem [thread:$0]  %s13, 2048, %s564, [#allocation8], 64, 64, 4
        $region60: #{fixed_duration_regulator.1} parent=11 // pred_fallthru
          _
        // Predicated region
        $region61: #{fixed_duration_regulator.1} parent=11 // pred_check
          %p570 = pneg %p367
        $region62: #{fixed_duration_regulator.1} parent=11 // pred_check_branch
          %572 = sbr.rel (%p570) target = $region64
        $region63: #{fixed_duration_regulator.1} parent=11 // pred_region
          _
        $region64: #{fixed_duration_regulator.1} parent=11 // pred_fallthru
          _
        // Predicated region
        $region65: #{fixed_duration_regulator.1} parent=11 // pred_check
          %p573 = pneg %p388
        $region66: #{fixed_duration_regulator.1} parent=11 // pred_check_branch
          %575 = sbr.rel (%p573) target = $region68
        $region67: #{fixed_duration_regulator.1} parent=11 // pred_region
          %s577 = ssub.s32 1024, 1024
          %578 = vsyncadd [#allocation8], %s577
          %s579 = sshll.u32 [#allocation9], 4
          %s580 = int_to_ptr.vmem [resolvable:$true] %s579
          %585 = dma.hbm_to_vmem [thread:$0]  %s15, 1024, %s580, [#allocation8], 64, 64, 4
        $region68: #{fixed_duration_regulator.1} parent=11 // pred_fallthru
          _
        // Predicated region
        $region69: #{fixed_duration_regulator.1} parent=11 // pred_check
          %p586 = pneg %p409
        $region70: #{fixed_duration_regulator.1} parent=11 // pred_check_branch
          %588 = sbr.rel (%p586) target = $region72
        $region71: #{fixed_duration_regulator.1} parent=11 // pred_region
          _
        $region72: #{fixed_duration_regulator.1} parent=11 // pred_fallthru
          _
        // Predicated region
        $region73: #{fixed_duration_regulator.1} parent=11 // pred_check
          %p589 = pneg %p430
        $region74: #{fixed_duration_regulator.1} parent=11 // pred_check_branch
          %591 = sbr.rel (%p589) target = $region76
        $region75: #{fixed_duration_regulator.1} parent=11 // pred_region
          _
        $region76: #{fixed_duration_regulator.1} parent=11 // pred_fallthru
          _
        // Predicated region
        $region77: #{fixed_duration_regulator.1} parent=11 // pred_check
          %p592 = pneg %p451
        $region78: #{fixed_duration_regulator.1} parent=11 // pred_check_branch
          %594 = sbr.rel (%p592) target = $region80
        $region79: #{fixed_duration_regulator.1} parent=11 // pred_region
          _
        $region80: #{fixed_duration_regulator.1} parent=11 // pred_fallthru
          _
      $region12: #{fixed_duration_regulator.1} parent=5 // pred_fallthru
        _
      %p595 = scmp.lt.s32.totalorder %s28, 2
      // Predicated region
      $region81: #{fixed_duration_regulator.1} parent=5 // pred_check
        %p596 = pneg %p595
      $region82: #{fixed_duration_regulator.1} parent=5 // pred_check_branch
        %598 = sbr.rel (%p596) target = $region84
      $region83: #{fixed_duration_regulator.1} parent=5 // pred_region
        // Predicated region
        $region85: #{fixed_duration_regulator.1} parent=83 // pred_check
          %p599 = pneg %p62
        $region86: #{fixed_duration_regulator.1} parent=83 // pred_check_branch
          %601 = sbr.rel (%p599) target = $region88
        $region87: #{fixed_duration_regulator.1} parent=83 // pred_region
          %p602 = scmp.lt.s32.totalorder %s35, 1
          %s603 = scalar_select %p602, %s35, 1
          %p604 = scmp.lt.s32.totalorder %s36, 0
          %s605 = scalar_select %p604, %s36, 0
          %s606 = smul.addr %s605, 3
          %s607 = smul.addr %s603, 3
          %s608 = sadd.s32 %s606, %s607
          %s609 = smul.addr %s608, 8
          %s610 = scalar_lea.vmem %s0, %s609
        $region88: #{fixed_duration_regulator.1} parent=83 // pred_fallthru
          _
        // Predicated region
        $region89: #{fixed_duration_regulator.1} parent=83 // pred_check
          %p611 = pneg %p88
        $region90: #{fixed_duration_regulator.1} parent=83 // pred_check_branch
          %613 = sbr.rel (%p611) target = $region92
        $region91: #{fixed_duration_regulator.1} parent=83 // pred_region
          %p614 = scmp.lt.s32.totalorder %s35, 1
          %s615 = scalar_select %p614, %s35, 1
          %s616 = scalar_lea.vmem %s1, %s615
        $region92: #{fixed_duration_regulator.1} parent=83 // pred_fallthru
          _
      $region84: #{fixed_duration_regulator.1} parent=5 // pred_fallthru
        _
      %p617 = scmp.le.s32.totalorder 1, %s28
      %p618 = scmp.lt.s32.totalorder %s28, 3
      %p619 = pnand %p617, %p618
      %p620 = pneg %p619
      // Predicated region
      $region93: #{fixed_duration_regulator.1} parent=5 // pred_check
        _
      $region94: #{fixed_duration_regulator.1} parent=5 // pred_check_branch
        %622 = sbr.rel (%p619) target = $region96
      $region95: #{fixed_duration_regulator.1} parent=5 // pred_region
        %s623 = ssub.s32 %s28, 1
        // Predicated region
        $region97: #{fixed_duration_regulator.1} parent=95 // pred_check
          %p624 = pneg %p115
        $region98: #{fixed_duration_regulator.1} parent=95 // pred_check_branch
          %626 = sbr.rel (%p624) target = $region100
        $region99: #{fixed_duration_regulator.1} parent=95 // pred_region
          %627 = dma.done [#allocation3], 9216
        $region100: #{fixed_duration_regulator.1} parent=95 // pred_fallthru
          _
        // Predicated region
        $region101: #{fixed_duration_regulator.1} parent=95 // pred_check
          %p628 = pneg %p136
        $region102: #{fixed_duration_regulator.1} parent=95 // pred_check_branch
          %630 = sbr.rel (%p628) target = $region104
        $region103: #{fixed_duration_regulator.1} parent=95 // pred_region
          %631 = dma.done [#allocation5], 3072
        $region104: #{fixed_duration_regulator.1} parent=95 // pred_fallthru
          _
        // Predicated region
        $region105: #{fixed_duration_regulator.1} parent=95 // pred_check
          %p632 = pneg %p262
        $region106: #{fixed_duration_regulator.1} parent=95 // pred_check_branch
          %634 = sbr.rel (%p632) target = $region108
        $region107: #{fixed_duration_regulator.1} parent=95 // pred_region
          %635 = dma.done [#allocation5], 4096
        $region108: #{fixed_duration_regulator.1} parent=95 // pred_fallthru
          _
        // Predicated region
        $region109: #{fixed_duration_regulator.1} parent=95 // pred_check
          %p636 = pneg %p346
        $region110: #{fixed_duration_regulator.1} parent=95 // pred_check_branch
          %638 = sbr.rel (%p636) target = $region112
        $region111: #{fixed_duration_regulator.1} parent=95 // pred_region
          %639 = dma.done [#allocation8], 2048
        $region112: #{fixed_duration_regulator.1} parent=95 // pred_fallthru
          _
        // Predicated region
        $region113: #{fixed_duration_regulator.1} parent=95 // pred_check
          %p640 = pneg %p388
        $region114: #{fixed_duration_regulator.1} parent=95 // pred_check_branch
          %642 = sbr.rel (%p640) target = $region116
        $region115: #{fixed_duration_regulator.1} parent=95 // pred_region
          %643 = dma.done [#allocation8], 1024
        $region116: #{fixed_duration_regulator.1} parent=95 // pred_fallthru
          _
        %p644 = scmp.lt.s32.totalorder %s37, 1
        %s645 = scalar_select %p644, %s37, 1
        %p646 = scmp.lt.s32.totalorder %s38, 0
        %s647 = scalar_select %p646, %s38, 0
        %s648 = smul.addr %s647, 3
        %s649 = smul.addr %s645, 3
        %s650 = sadd.s32 %s648, %s649
        %s651 = smul.addr %s650, 8
        %s652 = scalar_lea.vmem %s0, %s651
        %p653 = pneg %p68
        %p654 = pneg %p65
        %p655 = scmp.lt.s32.totalorder %s37, 1
        %s656 = scalar_select %p655, %s37, 1
        %s657 = scalar_lea.vmem %s1, %s656
        %p658 = pneg %p94
        %p659 = pneg %p91
        %p660 = pneg %p115
        %p661 = pneg %p112
        %p662 = pneg %p136
        %p663 = pneg %p133
        %p664 = pneg %p157
        %p665 = pneg %p154
        %p666 = pneg %p178
        %p667 = pneg %p175
        %p668 = pneg %p199
        %p669 = pneg %p196
        %p670 = pneg %p220
        %p671 = pneg %p217
        %p672 = pneg %p241
        %p673 = pneg %p238
        %p674 = pneg %p262
        %p675 = pneg %p259
        %p676 = pneg %p283
        %p677 = pneg %p280
        %p678 = pneg %p304
        %p679 = pneg %p301
        %p680 = pneg %p325
        %p681 = pneg %p322
        %p682 = pneg %p346
        %p683 = pneg %p343
        %p684 = pneg %p367
        %p685 = pneg %p364
        %p686 = pneg %p388
        %p687 = pneg %p385
        %p688 = pneg %p409
        %p689 = pneg %p406
        %p690 = pneg %p430
        %p691 = pneg %p427
        %p692 = pneg %p451
        %p693 = pneg %p448
        %p694 = pneg %p479
        %p695 = pneg %p476
        %p696 = scmp.lt.s32.totalorder %s37, 1
        %s697 = scalar_select %p696, %s37, 1
        %p698 = scmp.lt.s32.totalorder %s38, 0
        %s699 = scalar_select %p698, %s38, 0
        %s700 = sadd.s32 %s699, %s697
        %s701 = smul.addr %s700, 2
        %s702 = scalar_lea.vmem %s19, %s701
        %p703 = scmp.lt.s32.totalorder %s37, 1
        %s704 = scalar_select %p703, %s37, 1
        %p705 = scmp.lt.s32.totalorder %s38, 0
        %s706 = scalar_select %p705, %s38, 0
        %s707 = smul.addr %s706, 3
        %s708 = smul.addr %s704, 3
        %s709 = sadd.s32 %s707, %s708
        %s710 = smul.addr %s709, 8
        %s711 = scalar_lea.vmem %s0, %s710
        %p712 = scmp.lt.s32.totalorder %s37, 1
        %s713 = scalar_select %p712, %s37, 1
        %s714 = scalar_lea.vmem %s1, %s713
        %p715 = scmp.lt.s32.totalorder %s37, 1
        %s716 = scalar_select %p715, %s37, 1
        %p717 = scmp.lt.s32.totalorder %s38, 0
        %s718 = scalar_select %p717, %s38, 0
        %s719 = sadd.s32 %s718, %s716
        %s720 = smul.addr %s719, 2
        %s721 = scalar_lea.vmem %s19, %s720
        %v723 = vld [vmem:[%s711] sm:$0xff]
        %v724 = vld [vmem:[%s711 + $0x8] sm:$0xff]
        %v725 = vld [vmem:[%s711 + $0x10] sm:$0xff]
        %v726 = vpack.c.bf16 %v723, %v723
        %v727 = vpack.c.bf16 %v724, %v724
        %v728 = vpack.c.bf16 %v725, %v725
        %v729 = vld [vmem:[%s714] sm:$0x1]
        %v730 = vpack.c.bf16 %v729, %v729
        %v731 = vld [vmem:[#allocation4] sm:$0xff]
        %v732 = vld [vmem:[#allocation4 + $0x8] sm:$0xf]
        %v733 = vld [vmem:[#allocation4 + $0xc] sm:$0xff]
        %v734 = vld [vmem:[#allocation4 + $0x14] sm:$0xf]
        %v735 = vld [vmem:[#allocation4 + $0x18] sm:$0xff]
        %v736 = vld [vmem:[#allocation4 + $0x20] sm:$0xf]
        %v737 = vld [vmem:[#allocation4 + $0x24] sm:$0xff]
        %v738 = vld [vmem:[#allocation4 + $0x2c] sm:$0xf]
        %v739 = vld [vmem:[#allocation4 + $0x30] sm:$0xff]
        %v740 = vld [vmem:[#allocation4 + $0x38] sm:$0xf]
        %v741 = vld [vmem:[#allocation4 + $0x3c] sm:$0xff]
        %v742 = vld [vmem:[#allocation4 + $0x44] sm:$0xf]
        %v743 = vld [vmem:[#allocation4 + $0x48] sm:$0xff]
        %v744 = vld [vmem:[#allocation4 + $0x50] sm:$0xf]
        %v745 = vld [vmem:[#allocation4 + $0x54] sm:$0xff]
        %v746 = vld [vmem:[#allocation4 + $0x5c] sm:$0xf]
        %v747 = vld [vmem:[#allocation4 + $0x60] sm:$0xff]
        %v748 = vld [vmem:[#allocation4 + $0x68] sm:$0xf]
        %v749 = vld [vmem:[#allocation4 + $0x6c] sm:$0xff]
        %v750 = vld [vmem:[#allocation4 + $0x74] sm:$0xf]
        %v751 = vld [vmem:[#allocation4 + $0x78] sm:$0xff]
        %v752 = vld [vmem:[#allocation4 + $0x80] sm:$0xf]
        %v753 = vld [vmem:[#allocation4 + $0x84] sm:$0xff]
        %v754 = vld [vmem:[#allocation4 + $0x8c] sm:$0xf]
        %v755 = vld [vmem:[#allocation4 + $0x90] sm:$0xff]
        %v756 = vld [vmem:[#allocation4 + $0x98] sm:$0xf]
        %v757 = vld [vmem:[#allocation4 + $0x9c] sm:$0xff]
        %v758 = vld [vmem:[#allocation4 + $0xa4] sm:$0xf]
        %v759 = vld [vmem:[#allocation4 + $0xa8] sm:$0xff]
        %v760 = vld [vmem:[#allocation4 + $0xb0] sm:$0xf]
        %v761 = vld [vmem:[#allocation4 + $0xb4] sm:$0xff]
        %v762 = vld [vmem:[#allocation4 + $0xbc] sm:$0xf]
        %v795 = vunpack.c.l.b16 %v731
        %v796 = vunpack.c.h.b16 %v731
        %v797 = vunpack.c.l.b16 %v732
        %v798 = vunpack.c.l.b16 %v733
        %v799 = vunpack.c.h.b16 %v733
        %v800 = vunpack.c.l.b16 %v734
        %v801 = vunpack.c.l.b16 %v735
        %v802 = vunpack.c.h.b16 %v735
        %v803 = vunpack.c.l.b16 %v736
        %v804 = vunpack.c.l.b16 %v737
        %v805 = vunpack.c.h.b16 %v737
        %v806 = vunpack.c.l.b16 %v738
        %v807 = vunpack.c.l.b16 %v739
        %v808 = vunpack.c.h.b16 %v739
        %v809 = vunpack.c.l.b16 %v740
        %v810 = vunpack.c.l.b16 %v741
        %v811 = vunpack.c.h.b16 %v741
        %v812 = vunpack.c.l.b16 %v742
        %v813 = vunpack.c.l.b16 %v743
        %v814 = vunpack.c.h.b16 %v743
        %v815 = vunpack.c.l.b16 %v744
        %v816 = vunpack.c.l.b16 %v745
        %v817 = vunpack.c.h.b16 %v745
        %v818 = vunpack.c.l.b16 %v746
        %v819 = vunpack.c.l.b16 %v747
        %v820 = vunpack.c.h.b16 %v747
        %v821 = vunpack.c.l.b16 %v748
        %v822 = vunpack.c.l.b16 %v749
        %v823 = vunpack.c.h.b16 %v749
        %v824 = vunpack.c.l.b16 %v750
        %v825 = vunpack.c.l.b16 %v751
        %v826 = vunpack.c.h.b16 %v751
        %v827 = vunpack.c.l.b16 %v752
        %v828 = vunpack.c.l.b16 %v753
        %v829 = vunpack.c.h.b16 %v753
        %v830 = vunpack.c.l.b16 %v754
        %v831 = vunpack.c.l.b16 %v755
        %v832 = vunpack.c.h.b16 %v755
        %v833 = vunpack.c.l.b16 %v756
        %v834 = vunpack.c.l.b16 %v757
        %v835 = vunpack.c.h.b16 %v757
        %v836 = vunpack.c.l.b16 %v758
        %v837 = vunpack.c.l.b16 %v759
        %v838 = vunpack.c.h.b16 %v759
        %v839 = vunpack.c.l.b16 %v760
        %v840 = vunpack.c.l.b16 %v761
        %v841 = vunpack.c.h.b16 %v761
        %v842 = vunpack.c.l.b16 %v762
        %v843 = vpack.c.b16 %v798, %v795
        %v844 = vpack.c.b16 %v799, %v796
        %v845 = vpack.c.b16 %v800, %v797
        %v846 = vpack.c.b16 %v804, %v801
        %v847 = vpack.c.b16 %v805, %v802
        %v848 = vpack.c.b16 %v806, %v803
        %v849 = vpack.c.b16 %v810, %v807
        %v850 = vpack.c.b16 %v811, %v808
        %v851 = vpack.c.b16 %v812, %v809
        %v852 = vpack.c.b16 %v816, %v813
        %v853 = vpack.c.b16 %v817, %v814
        %v854 = vpack.c.b16 %v818, %v815
        %v855 = vpack.c.b16 %v822, %v819
        %v856 = vpack.c.b16 %v823, %v820
        %v857 = vpack.c.b16 %v824, %v821
        %v858 = vpack.c.b16 %v828, %v825
        %v859 = vpack.c.b16 %v829, %v826
        %v860 = vpack.c.b16 %v830, %v827
        %v861 = vpack.c.b16 %v834, %v831
        %v862 = vpack.c.b16 %v835, %v832
        %v863 = vpack.c.b16 %v836, %v833
        %v864 = vpack.c.b16 %v840, %v837
        %v865 = vpack.c.b16 %v841, %v838
        %v866 = vpack.c.b16 %v842, %v839
        %891 = vmatprep.subr.bf16.mxu0 %v844
        %892 = vmatpush1.bf16.msra.mxu0 %v843
        %893 = vmatprep.subr.bf16.mxu0 %v847
        %894 = vmatpush1.bf16.msra.mxu0 %v846
        %895 = vmatprep.subr.bf16.mxu0 %v850
        %896 = vmatpush1.bf16.msra.mxu0 %v849
        %897 = vmatprep.subr.bf16.mxu0 %v853
        %898 = vmatpush1.bf16.msra.mxu0 %v852
        %899 = vmatprep.subr.bf16.mxu0 %v856
        %900 = vmatpush1.bf16.msra.mxu0 %v855
        %901 = vmatprep.subr.bf16.mxu0 %v859
        %902 = vmatpush1.bf16.msra.mxu0 %v858
        %903 = vmatprep.subr.bf16.mxu0 %v862
        %904 = vmatpush1.bf16.msra.mxu0 %v861
        %905 = vmatprep.subr.bf16.mxu0 %v865
        %906 = vmatpush1.bf16.msra.mxu0 %v864
        %907 = vmatprep.subr.bf16.mxu0 0
        %908 = vmatpush1.bf16.msra.mxu0 0
        %909 = vmatprep.subr.bf16.mxu0 0
        %910 = vmatpush1.bf16.msra.mxu0 0
        %911 = vmatprep.subr.bf16.mxu0 0
        %912 = vmatpush1.bf16.msra.mxu0 0
        %913 = vmatprep.subr.bf16.mxu0 0
        %914 = vmatpush1.bf16.msra.mxu0 0
        %915 = vmatprep.subr.bf16.mxu0 0
        %916 = vmatpush1.bf16.msra.mxu0 0
        %917 = vmatprep.subr.bf16.mxu0 0
        %918 = vmatpush1.bf16.msra.mxu0 0
        %919 = vmatprep.subr.bf16.mxu0 0
        %920 = vmatpush1.bf16.msra.mxu0 0
        %921 = vmatprep.subr.bf16.mxu0 0
        %922 = vmatpush1.bf16.msra.mxu0 0
        %923 = vmatprep.mubr.bf16.mxu0 0
        %924 = vmatmul.mubr.bf16.gmra.mrb[0].mxu0 %v730
        %v925 = vpop.f32.mrb[0].mxu0
        %v926 = vadd.f32 0.0, %v925
        %v927 = vpop.f32.mrb[0].mxu0
        %v928 = vadd.f32 0.0, %v927
        %v929 = vpop.f32.mrb[0].mxu0
        %v930 = vpop.f32.mrb[0].mxu0
        %931 = vdwg.mxu0
        %932 = vmatprep.subr.bf16.mxu0 0
        %933 = vmatpush1.bf16.msra.mxu0 %v845
        %934 = vmatprep.subr.bf16.mxu0 0
        %935 = vmatpush1.bf16.msra.mxu0 %v848
        %936 = vmatprep.subr.bf16.mxu0 0
        %937 = vmatpush1.bf16.msra.mxu0 %v851
        %938 = vmatprep.subr.bf16.mxu0 0
        %939 = vmatpush1.bf16.msra.mxu0 %v854
        %940 = vmatprep.subr.bf16.mxu0 0
        %941 = vmatpush1.bf16.msra.mxu0 %v857
        %942 = vmatprep.subr.bf16.mxu0 0
        %943 = vmatpush1.bf16.msra.mxu0 %v860
        %944 = vmatprep.subr.bf16.mxu0 0
        %945 = vmatpush1.bf16.msra.mxu0 %v863
        %946 = vmatprep.subr.bf16.mxu0 0
        %947 = vmatpush1.bf16.msra.mxu0 %v866
        %948 = vmatprep.subr.bf16.mxu0 0
        %949 = vmatpush1.bf16.msra.mxu0 0
        %950 = vmatprep.subr.bf16.mxu0 0
        %951 = vmatpush1.bf16.msra.mxu0 0
        %952 = vmatprep.subr.bf16.mxu0 0
        %953 = vmatpush1.bf16.msra.mxu0 0
        %954 = vmatprep.subr.bf16.mxu0 0
        %955 = vmatpush1.bf16.msra.mxu0 0
        %956 = vmatprep.subr.bf16.mxu0 0
        %957 = vmatpush1.bf16.msra.mxu0 0
        %958 = vmatprep.subr.bf16.mxu0 0
        %959 = vmatpush1.bf16.msra.mxu0 0
        %960 = vmatprep.subr.bf16.mxu0 0
        %961 = vmatpush1.bf16.msra.mxu0 0
        %962 = vmatprep.subr.bf16.mxu0 0
        %963 = vmatpush1.bf16.msra.mxu0 0
        %964 = vmatprep.mubr.bf16.mxu0 0
        %965 = vmatmul.mubr.bf16.gmra.mrb[0].mxu0 %v730
        %v966 = vpop.f32.mrb[0].mxu0
        %v967 = vadd.f32 0.0, %v966
        %v968 = vpop.f32.mrb[0].mxu0
        %v969 = vpop.f32.mrb[0].mxu0
        %v970 = vpop.f32.mrb[0].mxu0
        %971 = vdwg.mxu0
        %v972 = vld [vmem:[#allocation2] sm:$0xff]
        %v973 = vld [vmem:[#allocation2 + $0x8] sm:$0xf]
        %v974 = vld [vmem:[#allocation2 + $0xc] sm:$0xff]
        %v975 = vld [vmem:[#allocation2 + $0x14] sm:$0xf]
        %v976 = vld [vmem:[#allocation2 + $0x18] sm:$0xff]
        %v977 = vld [vmem:[#allocation2 + $0x20] sm:$0xf]
        %v978 = vld [vmem:[#allocation2 + $0x24] sm:$0xff]
        %v979 = vld [vmem:[#allocation2 + $0x2c] sm:$0xf]
        %v980 = vld [vmem:[#allocation2 + $0x30] sm:$0xff]
        %v981 = vld [vmem:[#allocation2 + $0x38] sm:$0xf]
        %v982 = vld [vmem:[#allocation2 + $0x3c] sm:$0xff]
        %v983 = vld [vmem:[#allocation2 + $0x44] sm:$0xf]
        %v984 = vld [vmem:[#allocation2 + $0x48] sm:$0xff]
        %v985 = vld [vmem:[#allocation2 + $0x50] sm:$0xf]
        %v986 = vld [vmem:[#allocation2 + $0x54] sm:$0xff]
        %v987 = vld [vmem:[#allocation2 + $0x5c] sm:$0xf]
        %v988 = vld [vmem:[#allocation2 + $0x60] sm:$0xff]
        %v989 = vld [vmem:[#allocation2 + $0x68] sm:$0xf]
        %v990 = vld [vmem:[#allocation2 + $0x6c] sm:$0xff]
        %v991 = vld [vmem:[#allocation2 + $0x74] sm:$0xf]
        %v992 = vld [vmem:[#allocation2 + $0x78] sm:$0xff]
        %v993 = vld [vmem:[#allocation2 + $0x80] sm:$0xf]
        %v994 = vld [vmem:[#allocation2 + $0x84] sm:$0xff]
        %v995 = vld [vmem:[#allocation2 + $0x8c] sm:$0xf]
        %v996 = vld [vmem:[#allocation2 + $0x90] sm:$0xff]
        %v997 = vld [vmem:[#allocation2 + $0x98] sm:$0xf]
        %v998 = vld [vmem:[#allocation2 + $0x9c] sm:$0xff]
        %v999 = vld [vmem:[#allocation2 + $0xa4] sm:$0xf]
        %v1000 = vld [vmem:[#allocation2 + $0xa8] sm:$0xff]
        %v1001 = vld [vmem:[#allocation2 + $0xb0] sm:$0xf]
        %v1002 = vld [vmem:[#allocation2 + $0xb4] sm:$0xff]
        %v1003 = vld [vmem:[#allocation2 + $0xbc] sm:$0xf]
        %v1004 = vld [vmem:[#allocation2 + $0xc0] sm:$0xff]
        %v1005 = vld [vmem:[#allocation2 + $0xc8] sm:$0xf]
        %v1006 = vld [vmem:[#allocation2 + $0xcc] sm:$0xff]
        %v1007 = vld [vmem:[#allocation2 + $0xd4] sm:$0xf]
        %v1008 = vld [vmem:[#allocation2 + $0xd8] sm:$0xff]
        %v1009 = vld [vmem:[#allocation2 + $0xe0] sm:$0xf]
        %v1010 = vld [vmem:[#allocation2 + $0xe4] sm:$0xff]
        %v1011 = vld [vmem:[#allocation2 + $0xec] sm:$0xf]
        %v1012 = vld [vmem:[#allocation2 + $0xf0] sm:$0xff]
        %v1013 = vld [vmem:[#allocation2 + $0xf8] sm:$0xf]
        %v1014 = vld [vmem:[#allocation2 + $0xfc] sm:$0xff]
        %v1015 = vld [vmem:[#allocation2 + $0x104] sm:$0xf]
        %v1016 = vld [vmem:[#allocation2 + $0x108] sm:$0xff]
        %v1017 = vld [vmem:[#allocation2 + $0x110] sm:$0xf]
        %v1018 = vld [vmem:[#allocation2 + $0x114] sm:$0xff]
        %v1019 = vld [vmem:[#allocation2 + $0x11c] sm:$0xf]
        %v1020 = vld [vmem:[#allocation2 + $0x120] sm:$0xff]
        %v1021 = vld [vmem:[#allocation2 + $0x128] sm:$0xf]
        %v1022 = vld [vmem:[#allocation2 + $0x12c] sm:$0xff]
        %v1023 = vld [vmem:[#allocation2 + $0x134] sm:$0xf]
        %v1024 = vld [vmem:[#allocation2 + $0x138] sm:$0xff]
        %v1025 = vld [vmem:[#allocation2 + $0x140] sm:$0xf]
        %v1026 = vld [vmem:[#allocation2 + $0x144] sm:$0xff]
        %v1027 = vld [vmem:[#allocation2 + $0x14c] sm:$0xf]
        %v1028 = vld [vmem:[#allocation2 + $0x150] sm:$0xff]
        %v1029 = vld [vmem:[#allocation2 + $0x158] sm:$0xf]
        %v1030 = vld [vmem:[#allocation2 + $0x15c] sm:$0xff]
        %v1031 = vld [vmem:[#allocation2 + $0x164] sm:$0xf]
        %v1032 = vld [vmem:[#allocation2 + $0x168] sm:$0xff]
        %v1033 = vld [vmem:[#allocation2 + $0x170] sm:$0xf]
        %v1034 = vld [vmem:[#allocation2 + $0x174] sm:$0xff]
        %v1035 = vld [vmem:[#allocation2 + $0x17c] sm:$0xf]
        %v1036 = vld [vmem:[#allocation2 + $0x180] sm:$0xff]
        %v1037 = vld [vmem:[#allocation2 + $0x188] sm:$0xf]
        %v1038 = vld [vmem:[#allocation2 + $0x18c] sm:$0xff]
        %v1039 = vld [vmem:[#allocation2 + $0x194] sm:$0xf]
        %v1040 = vld [vmem:[#allocation2 + $0x198] sm:$0xff]
        %v1041 = vld [vmem:[#allocation2 + $0x1a0] sm:$0xf]
        %v1042 = vld [vmem:[#allocation2 + $0x1a4] sm:$0xff]
        %v1043 = vld [vmem:[#allocation2 + $0x1ac] sm:$0xf]
        %v1044 = vld [vmem:[#allocation2 + $0x1b0] sm:$0xff]
        %v1045 = vld [vmem:[#allocation2 + $0x1b8] sm:$0xf]
        %v1046 = vld [vmem:[#allocation2 + $0x1bc] sm:$0xff]
        %v1047 = vld [vmem:[#allocation2 + $0x1c4] sm:$0xf]
        %v1048 = vld [vmem:[#allocation2 + $0x1c8] sm:$0xff]
        %v1049 = vld [vmem:[#allocation2 + $0x1d0] sm:$0xf]
        %v1050 = vld [vmem:[#allocation2 + $0x1d4] sm:$0xff]
        %v1051 = vld [vmem:[#allocation2 + $0x1dc] sm:$0xf]
        %v1052 = vld [vmem:[#allocation2 + $0x1e0] sm:$0xff]
        %v1053 = vld [vmem:[#allocation2 + $0x1e8] sm:$0xf]
        %v1054 = vld [vmem:[#allocation2 + $0x1ec] sm:$0xff]
        %v1055 = vld [vmem:[#allocation2 + $0x1f4] sm:$0xf]
        %v1056 = vld [vmem:[#allocation2 + $0x1f8] sm:$0xff]
        %v1057 = vld [vmem:[#allocation2 + $0x200] sm:$0xf]
        %v1058 = vld [vmem:[#allocation2 + $0x204] sm:$0xff]
        %v1059 = vld [vmem:[#allocation2 + $0x20c] sm:$0xf]
        %v1060 = vld [vmem:[#allocation2 + $0x210] sm:$0xff]
        %v1061 = vld [vmem:[#allocation2 + $0x218] sm:$0xf]
        %v1062 = vld [vmem:[#allocation2 + $0x21c] sm:$0xff]
        %v1063 = vld [vmem:[#allocation2 + $0x224] sm:$0xf]
        %v1064 = vld [vmem:[#allocation2 + $0x228] sm:$0xff]
        %v1065 = vld [vmem:[#allocation2 + $0x230] sm:$0xf]
        %v1066 = vld [vmem:[#allocation2 + $0x234] sm:$0xff]
        %v1067 = vld [vmem:[#allocation2 + $0x23c] sm:$0xf]
        %v1068 = vlaneseq
        %v1069 = vshrl.u32 %v1068, 7
        %v1070 = vsub.s32 0, %v1069
        %v1071 = vrot.slane %v926, %v1070
        %v1072 = vlaneseq
        %v1073 = vshrl.u32 %v1072, 7
        %v1074 = vsub.s32 0, %v1073
        %v1075 = vrot.slane %v928, %v1074
        %v1076 = vlaneseq
        %v1077 = vshrl.u32 %v1076, 7
        %v1078 = vsub.s32 0, %v1077
        %v1079 = vrot.slane %v967, %v1078
        %v1176 = vunpack.c.l.b16 %v972
        %v1177 = vunpack.c.h.b16 %v972
        %v1178 = vunpack.c.l.b16 %v973
        %v1179 = vunpack.c.l.b16 %v974
        %v1180 = vunpack.c.h.b16 %v974
        %v1181 = vunpack.c.l.b16 %v975
        %v1182 = vunpack.c.l.b16 %v976
        %v1183 = vunpack.c.h.b16 %v976
        %v1184 = vunpack.c.l.b16 %v977
        %v1185 = vunpack.c.l.b16 %v978
        %v1186 = vunpack.c.h.b16 %v978
        %v1187 = vunpack.c.l.b16 %v979
        %v1188 = vunpack.c.l.b16 %v980
        %v1189 = vunpack.c.h.b16 %v980
        %v1190 = vunpack.c.l.b16 %v981
        %v1191 = vunpack.c.l.b16 %v982
        %v1192 = vunpack.c.h.b16 %v982
        %v1193 = vunpack.c.l.b16 %v983
        %v1194 = vunpack.c.l.b16 %v984
        %v1195 = vunpack.c.h.b16 %v984
        %v1196 = vunpack.c.l.b16 %v985
        %v1197 = vunpack.c.l.b16 %v986
        %v1198 = vunpack.c.h.b16 %v986
        %v1199 = vunpack.c.l.b16 %v987
        %v1200 = vunpack.c.l.b16 %v988
        %v1201 = vunpack.c.h.b16 %v988
        %v1202 = vunpack.c.l.b16 %v989
        %v1203 = vunpack.c.l.b16 %v990
        %v1204 = vunpack.c.h.b16 %v990
        %v1205 = vunpack.c.l.b16 %v991
        %v1206 = vunpack.c.l.b16 %v992
        %v1207 = vunpack.c.h.b16 %v992
        %v1208 = vunpack.c.l.b16 %v993
        %v1209 = vunpack.c.l.b16 %v994
        %v1210 = vunpack.c.h.b16 %v994
        %v1211 = vunpack.c.l.b16 %v995
        %v1212 = vunpack.c.l.b16 %v996
        %v1213 = vunpack.c.h.b16 %v996
        %v1214 = vunpack.c.l.b16 %v997
        %v1215 = vunpack.c.l.b16 %v998
        %v1216 = vunpack.c.h.b16 %v998
        %v1217 = vunpack.c.l.b16 %v999
        %v1218 = vunpack.c.l.b16 %v1000
        %v1219 = vunpack.c.h.b16 %v1000
        %v1220 = vunpack.c.l.b16 %v1001
        %v1221 = vunpack.c.l.b16 %v1002
        %v1222 = vunpack.c.h.b16 %v1002
        %v1223 = vunpack.c.l.b16 %v1003
        %v1224 = vunpack.c.l.b16 %v1004
        %v1225 = vunpack.c.h.b16 %v1004
        %v1226 = vunpack.c.l.b16 %v1005
        %v1227 = vunpack.c.l.b16 %v1006
        %v1228 = vunpack.c.h.b16 %v1006
        %v1229 = vunpack.c.l.b16 %v1007
        %v1230 = vunpack.c.l.b16 %v1008
        %v1231 = vunpack.c.h.b16 %v1008
        %v1232 = vunpack.c.l.b16 %v1009
        %v1233 = vunpack.c.l.b16 %v1010
        %v1234 = vunpack.c.h.b16 %v1010
        %v1235 = vunpack.c.l.b16 %v1011
        %v1236 = vunpack.c.l.b16 %v1012
        %v1237 = vunpack.c.h.b16 %v1012
        %v1238 = vunpack.c.l.b16 %v1013
        %v1239 = vunpack.c.l.b16 %v1014
        %v1240 = vunpack.c.h.b16 %v1014
        %v1241 = vunpack.c.l.b16 %v1015
        %v1242 = vunpack.c.l.b16 %v1016
        %v1243 = vunpack.c.h.b16 %v1016
        %v1244 = vunpack.c.l.b16 %v1017
        %v1245 = vunpack.c.l.b16 %v1018
        %v1246 = vunpack.c.h.b16 %v1018
        %v1247 = vunpack.c.l.b16 %v1019
        %v1248 = vunpack.c.l.b16 %v1020
        %v1249 = vunpack.c.h.b16 %v1020
        %v1250 = vunpack.c.l.b16 %v1021
        %v1251 = vunpack.c.l.b16 %v1022
        %v1252 = vunpack.c.h.b16 %v1022
        %v1253 = vunpack.c.l.b16 %v1023
        %v1254 = vunpack.c.l.b16 %v1024
        %v1255 = vunpack.c.h.b16 %v1024
        %v1256 = vunpack.c.l.b16 %v1025
        %v1257 = vunpack.c.l.b16 %v1026
        %v1258 = vunpack.c.h.b16 %v1026
        %v1259 = vunpack.c.l.b16 %v1027
        %v1260 = vunpack.c.l.b16 %v1028
        %v1261 = vunpack.c.h.b16 %v1028
        %v1262 = vunpack.c.l.b16 %v1029
        %v1263 = vunpack.c.l.b16 %v1030
        %v1264 = vunpack.c.h.b16 %v1030
        %v1265 = vunpack.c.l.b16 %v1031
        %v1266 = vunpack.c.l.b16 %v1032
        %v1267 = vunpack.c.h.b16 %v1032
        %v1268 = vunpack.c.l.b16 %v1033
        %v1269 = vunpack.c.l.b16 %v1034
        %v1270 = vunpack.c.h.b16 %v1034
        %v1271 = vunpack.c.l.b16 %v1035
        %v1272 = vunpack.c.l.b16 %v1036
        %v1273 = vunpack.c.h.b16 %v1036
        %v1274 = vunpack.c.l.b16 %v1037
        %v1275 = vunpack.c.l.b16 %v1038
        %v1276 = vunpack.c.h.b16 %v1038
        %v1277 = vunpack.c.l.b16 %v1039
        %v1278 = vunpack.c.l.b16 %v1040
        %v1279 = vunpack.c.h.b16 %v1040
        %v1280 = vunpack.c.l.b16 %v1041
        %v1281 = vunpack.c.l.b16 %v1042
        %v1282 = vunpack.c.h.b16 %v1042
        %v1283 = vunpack.c.l.b16 %v1043
        %v1284 = vunpack.c.l.b16 %v1044
        %v1285 = vunpack.c.h.b16 %v1044
        %v1286 = vunpack.c.l.b16 %v1045
        %v1287 = vunpack.c.l.b16 %v1046
        %v1288 = vunpack.c.h.b16 %v1046
        %v1289 = vunpack.c.l.b16 %v1047
        %v1290 = vunpack.c.l.b16 %v1048
        %v1291 = vunpack.c.h.b16 %v1048
        %v1292 = vunpack.c.l.b16 %v1049
        %v1293 = vunpack.c.l.b16 %v1050
        %v1294 = vunpack.c.h.b16 %v1050
        %v1295 = vunpack.c.l.b16 %v1051
        %v1296 = vunpack.c.l.b16 %v1052
        %v1297 = vunpack.c.h.b16 %v1052
        %v1298 = vunpack.c.l.b16 %v1053
        %v1299 = vunpack.c.l.b16 %v1054
        %v1300 = vunpack.c.h.b16 %v1054
        %v1301 = vunpack.c.l.b16 %v1055
        %v1302 = vunpack.c.l.b16 %v1056
        %v1303 = vunpack.c.h.b16 %v1056
        %v1304 = vunpack.c.l.b16 %v1057
        %v1305 = vunpack.c.l.b16 %v1058
        %v1306 = vunpack.c.h.b16 %v1058
        %v1307 = vunpack.c.l.b16 %v1059
        %v1308 = vunpack.c.l.b16 %v1060
        %v1309 = vunpack.c.h.b16 %v1060
        %v1310 = vunpack.c.l.b16 %v1061
        %v1311 = vunpack.c.l.b16 %v1062
        %v1312 = vunpack.c.h.b16 %v1062
        %v1313 = vunpack.c.l.b16 %v1063
        %v1314 = vunpack.c.l.b16 %v1064
        %v1315 = vunpack.c.h.b16 %v1064
        %v1316 = vunpack.c.l.b16 %v1065
        %v1317 = vunpack.c.l.b16 %v1066
        %v1318 = vunpack.c.h.b16 %v1066
        %v1319 = vunpack.c.l.b16 %v1067
        %v1320 = vpack.c.b16 %v1179, %v1176
        %v1321 = vpack.c.b16 %v1180, %v1177
        %v1322 = vpack.c.b16 %v1181, %v1178
        %v1323 = vpack.c.b16 %v1185, %v1182
        %v1324 = vpack.c.b16 %v1186, %v1183
        %v1325 = vpack.c.b16 %v1187, %v1184
        %v1326 = vpack.c.b16 %v1191, %v1188
        %v1327 = vpack.c.b16 %v1192, %v1189
        %v1328 = vpack.c.b16 %v1193, %v1190
        %v1329 = vpack.c.b16 %v1197, %v1194
        %v1330 = vpack.c.b16 %v1198, %v1195
        %v1331 = vpack.c.b16 %v1199, %v1196
        %v1332 = vpack.c.b16 %v1203, %v1200
        %v1333 = vpack.c.b16 %v1204, %v1201
        %v1334 = vpack.c.b16 %v1205, %v1202
        %v1335 = vpack.c.b16 %v1209, %v1206
        %v1336 = vpack.c.b16 %v1210, %v1207
        %v1337 = vpack.c.b16 %v1211, %v1208
        %v1338 = vpack.c.b16 %v1215, %v1212
        %v1339 = vpack.c.b16 %v1216, %v1213
        %v1340 = vpack.c.b16 %v1217, %v1214
        %v1341 = vpack.c.b16 %v1221, %v1218
        %v1342 = vpack.c.b16 %v1222, %v1219
        %v1343 = vpack.c.b16 %v1223, %v1220
        %v1344 = vpack.c.b16 %v1227, %v1224
        %v1345 = vpack.c.b16 %v1228, %v1225
        %v1346 = vpack.c.b16 %v1229, %v1226
        %v1347 = vpack.c.b16 %v1233, %v1230
        %v1348 = vpack.c.b16 %v1234, %v1231
        %v1349 = vpack.c.b16 %v1235, %v1232
        %v1350 = vpack.c.b16 %v1239, %v1236
        %v1351 = vpack.c.b16 %v1240, %v1237
        %v1352 = vpack.c.b16 %v1241, %v1238
        %v1353 = vpack.c.b16 %v1245, %v1242
        %v1354 = vpack.c.b16 %v1246, %v1243
        %v1355 = vpack.c.b16 %v1247, %v1244
        %v1356 = vpack.c.b16 %v1251, %v1248
        %v1357 = vpack.c.b16 %v1252, %v1249
        %v1358 = vpack.c.b16 %v1253, %v1250
        %v1359 = vpack.c.b16 %v1257, %v1254
        %v1360 = vpack.c.b16 %v1258, %v1255
        %v1361 = vpack.c.b16 %v1259, %v1256
        %v1362 = vpack.c.b16 %v1263, %v1260
        %v1363 = vpack.c.b16 %v1264, %v1261
        %v1364 = vpack.c.b16 %v1265, %v1262
        %v1365 = vpack.c.b16 %v1269, %v1266
        %v1366 = vpack.c.b16 %v1270, %v1267
        %v1367 = vpack.c.b16 %v1271, %v1268
        %v1368 = vpack.c.b16 %v1275, %v1272
        %v1369 = vpack.c.b16 %v1276, %v1273
        %v1370 = vpack.c.b16 %v1277, %v1274
        %v1371 = vpack.c.b16 %v1281, %v1278
        %v1372 = vpack.c.b16 %v1282, %v1279
        %v1373 = vpack.c.b16 %v1283, %v1280
        %v1374 = vpack.c.b16 %v1287, %v1284
        %v1375 = vpack.c.b16 %v1288, %v1285
        %v1376 = vpack.c.b16 %v1289, %v1286
        %v1377 = vpack.c.b16 %v1293, %v1290
        %v1378 = vpack.c.b16 %v1294, %v1291
        %v1379 = vpack.c.b16 %v1295, %v1292
        %v1380 = vpack.c.b16 %v1299, %v1296
        %v1381 = vpack.c.b16 %v1300, %v1297
        %v1382 = vpack.c.b16 %v1301, %v1298
        %v1383 = vpack.c.b16 %v1305, %v1302
        %v1384 = vpack.c.b16 %v1306, %v1303
        %v1385 = vpack.c.b16 %v1307, %v1304
        %v1386 = vpack.c.b16 %v1311, %v1308
        %v1387 = vpack.c.b16 %v1312, %v1309
        %v1388 = vpack.c.b16 %v1313, %v1310
        %v1389 = vpack.c.b16 %v1317, %v1314
        %v1390 = vpack.c.b16 %v1318, %v1315
        %v1391 = vpack.c.b16 %v1319, %v1316
        %1464 = vmatprep.subr.bf16.mxu0 %v1321
        %1465 = vmatpush1.bf16.msra.mxu0 %v1320
        %1466 = vmatprep.subr.bf16.mxu0 %v1324
        %1467 = vmatpush1.bf16.msra.mxu0 %v1323
        %1468 = vmatprep.subr.bf16.mxu0 %v1327
        %1469 = vmatpush1.bf16.msra.mxu0 %v1326
        %1470 = vmatprep.subr.bf16.mxu0 %v1330
        %1471 = vmatpush1.bf16.msra.mxu0 %v1329
        %1472 = vmatprep.subr.bf16.mxu0 %v1333
        %1473 = vmatpush1.bf16.msra.mxu0 %v1332
        %1474 = vmatprep.subr.bf16.mxu0 %v1336
        %1475 = vmatpush1.bf16.msra.mxu0 %v1335
        %1476 = vmatprep.subr.bf16.mxu0 %v1339
        %1477 = vmatpush1.bf16.msra.mxu0 %v1338
        %1478 = vmatprep.subr.bf16.mxu0 %v1342
        %1479 = vmatpush1.bf16.msra.mxu0 %v1341
        %1480 = vmatprep.subr.bf16.mxu0 %v1345
        %1481 = vmatpush1.bf16.msra.mxu0 %v1344
        %1482 = vmatprep.subr.bf16.mxu0 %v1348
        %1483 = vmatpush1.bf16.msra.mxu0 %v1347
        %1484 = vmatprep.subr.bf16.mxu0 %v1351
        %1485 = vmatpush1.bf16.msra.mxu0 %v1350
        %1486 = vmatprep.subr.bf16.mxu0 %v1354
        %1487 = vmatpush1.bf16.msra.mxu0 %v1353
        %1488 = vmatprep.subr.bf16.mxu0 %v1357
        %1489 = vmatpush1.bf16.msra.mxu0 %v1356
        %1490 = vmatprep.subr.bf16.mxu0 %v1360
        %1491 = vmatpush1.bf16.msra.mxu0 %v1359
        %1492 = vmatprep.subr.bf16.mxu0 %v1363
        %1493 = vmatpush1.bf16.msra.mxu0 %v1362
        %1494 = vmatprep.subr.bf16.mxu0 %v1366
        %1495 = vmatpush1.bf16.msra.mxu0 %v1365
        %1496 = vmatprep.mubr.bf16.mxu0 %v727
        %1497 = vmatmul.mubr.bf16.gmra.mrb[0].mxu0 %v726
        %v1498 = vpop.f32.mrb[0].mxu0
        %v1499 = vadd.f32 %v1071, %v1498
        %v1500 = vpop.f32.mrb[0].mxu0
        %v1501 = vadd.f32 %v1075, %v1500
        %v1502 = vpop.f32.mrb[0].mxu0
        %v1503 = vpop.f32.mrb[0].mxu0
        %1504 = vdwg.mxu0
        %1505 = vmatprep.subr.bf16.mxu0 %v1369
        %1506 = vmatpush1.bf16.msra.mxu0 %v1368
        %1507 = vmatprep.subr.bf16.mxu0 %v1372
        %1508 = vmatpush1.bf16.msra.mxu0 %v1371
        %1509 = vmatprep.subr.bf16.mxu0 %v1375
        %1510 = vmatpush1.bf16.msra.mxu0 %v1374
        %1511 = vmatprep.subr.bf16.mxu0 %v1378
        %1512 = vmatpush1.bf16.msra.mxu0 %v1377
        %1513 = vmatprep.subr.bf16.mxu0 %v1381
        %1514 = vmatpush1.bf16.msra.mxu0 %v1380
        %1515 = vmatprep.subr.bf16.mxu0 %v1384
        %1516 = vmatpush1.bf16.msra.mxu0 %v1383
        %1517 = vmatprep.subr.bf16.mxu0 %v1387
        %1518 = vmatpush1.bf16.msra.mxu0 %v1386
        %1519 = vmatprep.subr.bf16.mxu0 %v1390
        %1520 = vmatpush1.bf16.msra.mxu0 %v1389
        %1521 = vmatprep.subr.bf16.mxu0 0
        %1522 = vmatpush1.bf16.msra.mxu0 0
        %1523 = vmatprep.subr.bf16.mxu0 0
        %1524 = vmatpush1.bf16.msra.mxu0 0
        %1525 = vmatprep.subr.bf16.mxu0 0
        %1526 = vmatpush1.bf16.msra.mxu0 0
        %1527 = vmatprep.subr.bf16.mxu0 0
        %1528 = vmatpush1.bf16.msra.mxu0 0
        %1529 = vmatprep.subr.bf16.mxu0 0
        %1530 = vmatpush1.bf16.msra.mxu0 0
        %1531 = vmatprep.subr.bf16.mxu0 0
        %1532 = vmatpush1.bf16.msra.mxu0 0
        %1533 = vmatprep.subr.bf16.mxu0 0
        %1534 = vmatpush1.bf16.msra.mxu0 0
        %1535 = vmatprep.subr.bf16.mxu0 0
        %1536 = vmatpush1.bf16.msra.mxu0 0
        %1537 = vmatprep.mubr.bf16.mxu0 0
        %1538 = vmatmul.mubr.bf16.gmra.mrb[0].mxu0 %v728
        %v1539 = vpop.f32.mrb[0].mxu0
        %v1540 = vadd.f32 %v1499, %v1539
        %v1541 = vpop.f32.mrb[0].mxu0
        %v1542 = vadd.f32 %v1501, %v1541
        %v1543 = vpop.f32.mrb[0].mxu0
        %v1544 = vpop.f32.mrb[0].mxu0
        %1545 = vdwg.mxu0
        %1546 = vmatprep.subr.bf16.mxu0 0
        %1547 = vmatpush1.bf16.msra.mxu0 %v1322
        %1548 = vmatprep.subr.bf16.mxu0 0
        %1549 = vmatpush1.bf16.msra.mxu0 %v1325
        %1550 = vmatprep.subr.bf16.mxu0 0
        %1551 = vmatpush1.bf16.msra.mxu0 %v1328
        %1552 = vmatprep.subr.bf16.mxu0 0
        %1553 = vmatpush1.bf16.msra.mxu0 %v1331
        %1554 = vmatprep.subr.bf16.mxu0 0
        %1555 = vmatpush1.bf16.msra.mxu0 %v1334
        %1556 = vmatprep.subr.bf16.mxu0 0
        %1557 = vmatpush1.bf16.msra.mxu0 %v1337
        %1558 = vmatprep.subr.bf16.mxu0 0
        %1559 = vmatpush1.bf16.msra.mxu0 %v1340
        %1560 = vmatprep.subr.bf16.mxu0 0
        %1561 = vmatpush1.bf16.msra.mxu0 %v1343
        %1562 = vmatprep.subr.bf16.mxu0 0
        %1563 = vmatpush1.bf16.msra.mxu0 %v1346
        %1564 = vmatprep.subr.bf16.mxu0 0
        %1565 = vmatpush1.bf16.msra.mxu0 %v1349
        %1566 = vmatprep.subr.bf16.mxu0 0
        %1567 = vmatpush1.bf16.msra.mxu0 %v1352
        %1568 = vmatprep.subr.bf16.mxu0 0
        %1569 = vmatpush1.bf16.msra.mxu0 %v1355
        %1570 = vmatprep.subr.bf16.mxu0 0
        %1571 = vmatpush1.bf16.msra.mxu0 %v1358
        %1572 = vmatprep.subr.bf16.mxu0 0
        %1573 = vmatpush1.bf16.msra.mxu0 %v1361
        %1574 = vmatprep.subr.bf16.mxu0 0
        %1575 = vmatpush1.bf16.msra.mxu0 %v1364
        %1576 = vmatprep.subr.bf16.mxu0 0
        %1577 = vmatpush1.bf16.msra.mxu0 %v1367
        %1578 = vmatprep.mubr.bf16.mxu0 %v727
        %1579 = vmatmul.mubr.bf16.gmra.mrb[0].mxu0 %v726
        %v1580 = vpop.f32.mrb[0].mxu0
        %v1581 = vadd.f32 %v1079, %v1580
        %v1582 = vpop.f32.mrb[0].mxu0
        %v1583 = vpop.f32.mrb[0].mxu0
        %v1584 = vpop.f32.mrb[0].mxu0
        %1585 = vdwg.mxu0
        %1586 = vmatprep.subr.bf16.mxu0 0
        %1587 = vmatpush1.bf16.msra.mxu0 %v1370
        %1588 = vmatprep.subr.bf16.mxu0 0
        %1589 = vmatpush1.bf16.msra.mxu0 %v1373
        %1590 = vmatprep.subr.bf16.mxu0 0
        %1591 = vmatpush1.bf16.msra.mxu0 %v1376
        %1592 = vmatprep.subr.bf16.mxu0 0
        %1593 = vmatpush1.bf16.msra.mxu0 %v1379
        %1594 = vmatprep.subr.bf16.mxu0 0
        %1595 = vmatpush1.bf16.msra.mxu0 %v1382
        %1596 = vmatprep.subr.bf16.mxu0 0
        %1597 = vmatpush1.bf16.msra.mxu0 %v1385
        %1598 = vmatprep.subr.bf16.mxu0 0
        %1599 = vmatpush1.bf16.msra.mxu0 %v1388
        %1600 = vmatprep.subr.bf16.mxu0 0
        %1601 = vmatpush1.bf16.msra.mxu0 %v1391
        %1602 = vmatprep.subr.bf16.mxu0 0
        %1603 = vmatpush1.bf16.msra.mxu0 0
        %1604 = vmatprep.subr.bf16.mxu0 0
        %1605 = vmatpush1.bf16.msra.mxu0 0
        %1606 = vmatprep.subr.bf16.mxu0 0
        %1607 = vmatpush1.bf16.msra.mxu0 0
        %1608 = vmatprep.subr.bf16.mxu0 0
        %1609 = vmatpush1.bf16.msra.mxu0 0
        %1610 = vmatprep.subr.bf16.mxu0 0
        %1611 = vmatpush1.bf16.msra.mxu0 0
        %1612 = vmatprep.subr.bf16.mxu0 0
        %1613 = vmatpush1.bf16.msra.mxu0 0
        %1614 = vmatprep.subr.bf16.mxu0 0
        %1615 = vmatpush1.bf16.msra.mxu0 0
        %1616 = vmatprep.subr.bf16.mxu0 0
        %1617 = vmatpush1.bf16.msra.mxu0 0
        %1618 = vmatprep.mubr.bf16.mxu0 0
        %1619 = vmatmul.mubr.bf16.gmra.mrb[0].mxu0 %v728
        %v1620 = vpop.f32.mrb[0].mxu0
        %v1621 = vadd.f32 %v1581, %v1620
        %v1622 = vpop.f32.mrb[0].mxu0
        %v1623 = vpop.f32.mrb[0].mxu0
        %v1624 = vpop.f32.mrb[0].mxu0
        %1625 = vdwg.mxu0
        %v1626 = vld [vmem:[%s4] sm:$0x7]
        %v1628 = vlaneseq
        %v1629 = vshrl.u32 %v1628, 7
        %v1630 = vsub.s32 0, %v1629
        %v1631 = vrot.slane %v1626, %v1630
        %v1632 = vlaneseq
        %v1633 = vshrl.u32 %v1632, 7
        %v1634 = vsub.s32 1, %v1633
        %v1635 = vrot.slane %v1626, %v1634
        %v1636 = vlaneseq
        %v1637 = vshrl.u32 %v1636, 7
        %v1638 = vsub.s32 2, %v1637
        %v1639 = vrot.slane %v1626, %v1638
        %v1643 = vadd.f32 %v1540, %v1631
        %v1644 = vadd.f32 %v1542, %v1635
        %v1645 = vadd.f32 %v1621, %v1639
        %v1646 = vld [vmem:[%s5] sm:$0x3]
        %v1647 = vld [vmem:[%s6] sm:$0x3]
        %v1648 = vadd.f32 %v1643, %v1644
        %1649 = vadd.xlane.f32.xlu0 %v1648
        %v1650 = vpop.xlane.xlu0 %1649
        %v1651 = vrcp.pop 256.0
        %v1652 = vmul.f32 %v1650, %v1651
        %v1653 = vsub.f32 %v1643, %v1652
        %v1654 = vsub.f32 %v1644, %v1652
        %v1655 = vmul.f32 %v1653, %v1653
        %v1656 = vmul.f32 %v1654, %v1654
        %v1657 = vadd.f32 %v1655, %v1656
        %1658 = vadd.xlane.f32.xlu0 %v1657
        %v1659 = vpop.xlane.xlu0 %1658
        %v1660 = vmul.f32 %v1659, %v1651
        %v1661 = vadd.f32 %v1660, 1e-05
        %v1662 = vrsqrt.pop %v1661
        %v1663 = vmul.f32 %v1653, %v1662
        %v1664 = vmul.f32 %v1654, %v1662
        %v1666 = vlaneseq
        %v1667 = vshrl.u32 %v1666, 7
        %v1668 = vsub.s32 0, %v1667
        %v1669 = vrot.slane %v1646, %v1668
        %v1670 = vlaneseq
        %v1671 = vshrl.u32 %v1670, 7
        %v1672 = vsub.s32 1, %v1671
        %v1673 = vrot.slane %v1646, %v1672
        %v1676 = vmul.f32 %v1663, %v1669
        %v1677 = vmul.f32 %v1664, %v1673
        %v1679 = vlaneseq
        %v1680 = vshrl.u32 %v1679, 7
        %v1681 = vsub.s32 0, %v1680
        %v1682 = vrot.slane %v1647, %v1681
        %v1683 = vlaneseq
        %v1684 = vshrl.u32 %v1683, 7
        %v1685 = vsub.s32 1, %v1684
        %v1686 = vrot.slane %v1647, %v1685
        %v1689 = vadd.f32 %v1676, %v1682
        %v1690 = vadd.f32 %v1677, %v1686
        %v1691 = vmul.f32 %v1689, %v1689
        %v1692 = vmul.f32 %v1690, %v1690
        %v1693 = vmul.f32 %v1689, %v1691
        %v1694 = vmul.f32 %v1690, %v1692
        %v1695 = vmul.f32 %v1693, 0.044715
        %v1696 = vmul.f32 %v1694, 0.044715
        %v1697 = vadd.f32 %v1689, %v1695
        %v1698 = vadd.f32 %v1690, %v1696
        %v1699 = vmul.f32 %v1697, 0.7978846
        %v1700 = vmul.f32 %v1698, 0.7978846
        %v1701 = vtanh.pop %v1699
        %v1702 = vtanh.pop %v1700
        %v1703 = vadd.f32 %v1701, 1.0
        %v1704 = vadd.f32 %v1702, 1.0
        %v1705 = vmul.f32 %v1703, 0.5
        %v1706 = vmul.f32 %v1704, 0.5
        %v1707 = vmul.f32 %v1689, %v1705
        %v1708 = vmul.f32 %v1690, %v1706
        %v1709 = vpack.c.bf16 %v1707, %v1707
        %v1710 = vpack.c.bf16 %v1708, %v1708
        %v1711 = vld [vmem:[#allocation6] sm:$0xff]
        %v1712 = vld [vmem:[#allocation6 + $0x8] sm:$0xff]
        %v1713 = vld [vmem:[#allocation6 + $0x10] sm:$0xff]
        %v1714 = vld [vmem:[#allocation6 + $0x18] sm:$0xff]
        %v1715 = vld [vmem:[#allocation6 + $0x20] sm:$0xff]
        %v1716 = vld [vmem:[#allocation6 + $0x28] sm:$0xff]
        %v1717 = vld [vmem:[#allocation6 + $0x30] sm:$0xff]
        %v1718 = vld [vmem:[#allocation6 + $0x38] sm:$0xff]
        %v1719 = vld [vmem:[#allocation6 + $0x40] sm:$0xff]
        %v1720 = vld [vmem:[#allocation6 + $0x48] sm:$0xff]
        %v1721 = vld [vmem:[#allocation6 + $0x50] sm:$0xff]
        %v1722 = vld [vmem:[#allocation6 + $0x58] sm:$0xff]
        %v1723 = vld [vmem:[#allocation6 + $0x60] sm:$0xff]
        %v1724 = vld [vmem:[#allocation6 + $0x68] sm:$0xff]
        %v1725 = vld [vmem:[#allocation6 + $0x70] sm:$0xff]
        %v1726 = vld [vmem:[#allocation6 + $0x78] sm:$0xff]
        %v1727 = vld [vmem:[#allocation6 + $0x80] sm:$0xff]
        %v1728 = vld [vmem:[#allocation6 + $0x88] sm:$0xff]
        %v1729 = vld [vmem:[#allocation6 + $0x90] sm:$0xff]
        %v1730 = vld [vmem:[#allocation6 + $0x98] sm:$0xff]
        %v1731 = vld [vmem:[#allocation6 + $0xa0] sm:$0xff]
        %v1732 = vld [vmem:[#allocation6 + $0xa8] sm:$0xff]
        %v1733 = vld [vmem:[#allocation6 + $0xb0] sm:$0xff]
        %v1734 = vld [vmem:[#allocation6 + $0xb8] sm:$0xff]
        %v1735 = vld [vmem:[#allocation6 + $0xc0] sm:$0xff]
        %v1736 = vld [vmem:[#allocation6 + $0xc8] sm:$0xff]
        %v1737 = vld [vmem:[#allocation6 + $0xd0] sm:$0xff]
        %v1738 = vld [vmem:[#allocation6 + $0xd8] sm:$0xff]
        %v1739 = vld [vmem:[#allocation6 + $0xe0] sm:$0xff]
        %v1740 = vld [vmem:[#allocation6 + $0xe8] sm:$0xff]
        %v1741 = vld [vmem:[#allocation6 + $0xf0] sm:$0xff]
        %v1742 = vld [vmem:[#allocation6 + $0xf8] sm:$0xff]
        %v1743 = vld [vmem:[%s10] sm:$0x3]
        %v1745 = vlaneseq
        %v1746 = vshrl.u32 %v1745, 7
        %v1747 = vsub.s32 0, %v1746
        %v1748 = vrot.slane %v1743, %v1747
        %v1749 = vlaneseq
        %v1750 = vshrl.u32 %v1749, 7
        %v1751 = vsub.s32 1, %v1750
        %v1752 = vrot.slane %v1743, %v1751
        %v1787 = vunpack.c.l.b16 %v1711
        %v1788 = vunpack.c.h.b16 %v1711
        %v1789 = vunpack.c.l.b16 %v1712
        %v1790 = vunpack.c.h.b16 %v1712
        %v1791 = vunpack.c.l.b16 %v1713
        %v1792 = vunpack.c.h.b16 %v1713
        %v1793 = vunpack.c.l.b16 %v1714
        %v1794 = vunpack.c.h.b16 %v1714
        %v1795 = vunpack.c.l.b16 %v1715
        %v1796 = vunpack.c.h.b16 %v1715
        %v1797 = vunpack.c.l.b16 %v1716
        %v1798 = vunpack.c.h.b16 %v1716
        %v1799 = vunpack.c.l.b16 %v1717
        %v1800 = vunpack.c.h.b16 %v1717
        %v1801 = vunpack.c.l.b16 %v1718
        %v1802 = vunpack.c.h.b16 %v1718
        %v1803 = vunpack.c.l.b16 %v1719
        %v1804 = vunpack.c.h.b16 %v1719
        %v1805 = vunpack.c.l.b16 %v1720
        %v1806 = vunpack.c.h.b16 %v1720
        %v1807 = vunpack.c.l.b16 %v1721
        %v1808 = vunpack.c.h.b16 %v1721
        %v1809 = vunpack.c.l.b16 %v1722
        %v1810 = vunpack.c.h.b16 %v1722
        %v1811 = vunpack.c.l.b16 %v1723
        %v1812 = vunpack.c.h.b16 %v1723
        %v1813 = vunpack.c.l.b16 %v1724
        %v1814 = vunpack.c.h.b16 %v1724
        %v1815 = vunpack.c.l.b16 %v1725
        %v1816 = vunpack.c.h.b16 %v1725
        %v1817 = vunpack.c.l.b16 %v1726
        %v1818 = vunpack.c.h.b16 %v1726
        %v1819 = vunpack.c.l.b16 %v1727
        %v1820 = vunpack.c.h.b16 %v1727
        %v1821 = vunpack.c.l.b16 %v1728
        %v1822 = vunpack.c.h.b16 %v1728
        %v1823 = vunpack.c.l.b16 %v1729
        %v1824 = vunpack.c.h.b16 %v1729
        %v1825 = vunpack.c.l.b16 %v1730
        %v1826 = vunpack.c.h.b16 %v1730
        %v1827 = vunpack.c.l.b16 %v1731
        %v1828 = vunpack.c.h.b16 %v1731
        %v1829 = vunpack.c.l.b16 %v1732
        %v1830 = vunpack.c.h.b16 %v1732
        %v1831 = vunpack.c.l.b16 %v1733
        %v1832 = vunpack.c.h.b16 %v1733
        %v1833 = vunpack.c.l.b16 %v1734
        %v1834 = vunpack.c.h.b16 %v1734
        %v1835 = vunpack.c.l.b16 %v1735
        %v1836 = vunpack.c.h.b16 %v1735
        %v1837 = vunpack.c.l.b16 %v1736
        %v1838 = vunpack.c.h.b16 %v1736
        %v1839 = vunpack.c.l.b16 %v1737
        %v1840 = vunpack.c.h.b16 %v1737
        %v1841 = vunpack.c.l.b16 %v1738
        %v1842 = vunpack.c.h.b16 %v1738
        %v1843 = vunpack.c.l.b16 %v1739
        %v1844 = vunpack.c.h.b16 %v1739
        %v1845 = vunpack.c.l.b16 %v1740
        %v1846 = vunpack.c.h.b16 %v1740
        %v1847 = vunpack.c.l.b16 %v1741
        %v1848 = vunpack.c.h.b16 %v1741
        %v1849 = vunpack.c.l.b16 %v1742
        %v1850 = vunpack.c.h.b16 %v1742
        %v1851 = vpack.c.b16 %v1789, %v1787
        %v1852 = vpack.c.b16 %v1790, %v1788
        %v1853 = vpack.c.b16 %v1793, %v1791
        %v1854 = vpack.c.b16 %v1794, %v1792
        %v1855 = vpack.c.b16 %v1797, %v1795
        %v1856 = vpack.c.b16 %v1798, %v1796
        %v1857 = vpack.c.b16 %v1801, %v1799
        %v1858 = vpack.c.b16 %v1802, %v1800
        %v1859 = vpack.c.b16 %v1805, %v1803
        %v1860 = vpack.c.b16 %v1806, %v1804
        %v1861 = vpack.c.b16 %v1809, %v1807
        %v1862 = vpack.c.b16 %v1810, %v1808
        %v1863 = vpack.c.b16 %v1813, %v1811
        %v1864 = vpack.c.b16 %v1814, %v1812
        %v1865 = vpack.c.b16 %v1817, %v1815
        %v1866 = vpack.c.b16 %v1818, %v1816
        %v1867 = vpack.c.b16 %v1821, %v1819
        %v1868 = vpack.c.b16 %v1822, %v1820
        %v1869 = vpack.c.b16 %v1825, %v1823
        %v1870 = vpack.c.b16 %v1826, %v1824
        %v1871 = vpack.c.b16 %v1829, %v1827
        %v1872 = vpack.c.b16 %v1830, %v1828
        %v1873 = vpack.c.b16 %v1833, %v1831
        %v1874 = vpack.c.b16 %v1834, %v1832
        %v1875 = vpack.c.b16 %v1837, %v1835
        %v1876 = vpack.c.b16 %v1838, %v1836
        %v1877 = vpack.c.b16 %v1841, %v1839
        %v1878 = vpack.c.b16 %v1842, %v1840
        %v1879 = vpack.c.b16 %v1845, %v1843
        %v1880 = vpack.c.b16 %v1846, %v1844
        %v1881 = vpack.c.b16 %v1849, %v1847
        %v1882 = vpack.c.b16 %v1850, %v1848
        %1915 = vmatprep.subr.bf16.mxu0 %v1852
        %1916 = vmatpush1.bf16.msra.mxu0 %v1851
        %1917 = vmatprep.subr.bf16.mxu0 %v1854
        %1918 = vmatpush1.bf16.msra.mxu0 %v1853
        %1919 = vmatprep.subr.bf16.mxu0 %v1856
        %1920 = vmatpush1.bf16.msra.mxu0 %v1855
        %1921 = vmatprep.subr.bf16.mxu0 %v1858
        %1922 = vmatpush1.bf16.msra.mxu0 %v1857
        %1923 = vmatprep.subr.bf16.mxu0 %v1860
        %1924 = vmatpush1.bf16.msra.mxu0 %v1859
        %1925 = vmatprep.subr.bf16.mxu0 %v1862
        %1926 = vmatpush1.bf16.msra.mxu0 %v1861
        %1927 = vmatprep.subr.bf16.mxu0 %v1864
        %1928 = vmatpush1.bf16.msra.mxu0 %v1863
        %1929 = vmatprep.subr.bf16.mxu0 %v1866
        %1930 = vmatpush1.bf16.msra.mxu0 %v1865
        %1931 = vmatprep.subr.bf16.mxu0 %v1868
        %1932 = vmatpush1.bf16.msra.mxu0 %v1867
        %1933 = vmatprep.subr.bf16.mxu0 %v1870
        %1934 = vmatpush1.bf16.msra.mxu0 %v1869
        %1935 = vmatprep.subr.bf16.mxu0 %v1872
        %1936 = vmatpush1.bf16.msra.mxu0 %v1871
        %1937 = vmatprep.subr.bf16.mxu0 %v1874
        %1938 = vmatpush1.bf16.msra.mxu0 %v1873
        %1939 = vmatprep.subr.bf16.mxu0 %v1876
        %1940 = vmatpush1.bf16.msra.mxu0 %v1875
        %1941 = vmatprep.subr.bf16.mxu0 %v1878
        %1942 = vmatpush1.bf16.msra.mxu0 %v1877
        %1943 = vmatprep.subr.bf16.mxu0 %v1880
        %1944 = vmatpush1.bf16.msra.mxu0 %v1879
        %1945 = vmatprep.subr.bf16.mxu0 %v1882
        %1946 = vmatpush1.bf16.msra.mxu0 %v1881
        %1947 = vmatprep.mubr.bf16.mxu0 %v1710
        %1948 = vmatmul.mubr.bf16.gmra.mrb[0].mxu0 %v1709
        %v1949 = vpop.f32.mrb[0].mxu0
        %v1950 = vadd.f32 %v1748, %v1949
        %v1951 = vpop.f32.mrb[0].mxu0
        %v1952 = vadd.f32 %v1752, %v1951
        %v1953 = vpop.f32.mrb[0].mxu0
        %v1954 = vpop.f32.mrb[0].mxu0
        %1955 = vdwg.mxu0
        %v1956 = vld [vmem:[%s11] sm:$0x3]
        %v1957 = vld [vmem:[%s12] sm:$0x3]
        %v1958 = vadd.f32 %v1950, %v1952
        %1959 = vadd.xlane.f32.xlu0 %v1958
        %v1960 = vpop.xlane.xlu0 %1959
        %v1961 = vmul.f32 %v1960, %v1651
        %v1962 = vsub.f32 %v1950, %v1961
        %v1963 = vsub.f32 %v1952, %v1961
        %v1964 = vmul.f32 %v1962, %v1962
        %v1965 = vmul.f32 %v1963, %v1963
        %v1966 = vadd.f32 %v1964, %v1965
        %1967 = vadd.xlane.f32.xlu0 %v1966
        %v1968 = vpop.xlane.xlu0 %1967
        %v1969 = vmul.f32 %v1968, %v1651
        %v1970 = vadd.f32 %v1969, 1e-05
        %v1971 = vrsqrt.pop %v1970
        %v1972 = vmul.f32 %v1962, %v1971
        %v1973 = vmul.f32 %v1963, %v1971
        %v1975 = vlaneseq
        %v1976 = vshrl.u32 %v1975, 7
        %v1977 = vsub.s32 0, %v1976
        %v1978 = vrot.slane %v1956, %v1977
        %v1979 = vlaneseq
        %v1980 = vshrl.u32 %v1979, 7
        %v1981 = vsub.s32 1, %v1980
        %v1982 = vrot.slane %v1956, %v1981
        %v1985 = vmul.f32 %v1972, %v1978
        %v1986 = vmul.f32 %v1973, %v1982
        %v1988 = vlaneseq
        %v1989 = vshrl.u32 %v1988, 7
        %v1990 = vsub.s32 0, %v1989
        %v1991 = vrot.slane %v1957, %v1990
        %v1992 = vlaneseq
        %v1993 = vshrl.u32 %v1992, 7
        %v1994 = vsub.s32 1, %v1993
        %v1995 = vrot.slane %v1957, %v1994
        %v1998 = vadd.f32 %v1985, %v1991
        %v1999 = vadd.f32 %v1986, %v1995
        %v2000 = vmul.f32 %v1998, %v1998
        %v2001 = vmul.f32 %v1999, %v1999
        %v2002 = vmul.f32 %v1998, %v2000
        %v2003 = vmul.f32 %v1999, %v2001
        %v2004 = vmul.f32 %v2002, 0.044715
        %v2005 = vmul.f32 %v2003, 0.044715
        %v2006 = vadd.f32 %v1998, %v2004
        %v2007 = vadd.f32 %v1999, %v2005
        %v2008 = vmul.f32 %v2006, 0.7978846
        %v2009 = vmul.f32 %v2007, 0.7978846
        %v2010 = vtanh.pop %v2008
        %v2011 = vtanh.pop %v2009
        %v2012 = vadd.f32 %v2010, 1.0
        %v2013 = vadd.f32 %v2011, 1.0
        %v2014 = vmul.f32 %v2012, 0.5
        %v2015 = vmul.f32 %v2013, 0.5
        %v2016 = vmul.f32 %v1998, %v2014
        %v2017 = vmul.f32 %v1999, %v2015
        %v2018 = vpack.c.bf16 %v2016, %v2016
        %v2019 = vpack.c.bf16 %v2017, %v2017
        %v2020 = vld [vmem:[#allocation7] sm:$0xf]
        %v2021 = vld [vmem:[#allocation7 + $0x4] sm:$0xf]
        %v2022 = vld [vmem:[#allocation7 + $0x8] sm:$0xf]
        %v2023 = vld [vmem:[#allocation7 + $0xc] sm:$0xf]
        %v2024 = vld [vmem:[#allocation7 + $0x10] sm:$0xf]
        %v2025 = vld [vmem:[#allocation7 + $0x14] sm:$0xf]
        %v2026 = vld [vmem:[#allocation7 + $0x18] sm:$0xf]
        %v2027 = vld [vmem:[#allocation7 + $0x1c] sm:$0xf]
        %v2028 = vld [vmem:[#allocation7 + $0x20] sm:$0xf]
        %v2029 = vld [vmem:[#allocation7 + $0x24] sm:$0xf]
        %v2030 = vld [vmem:[#allocation7 + $0x28] sm:$0xf]
        %v2031 = vld [vmem:[#allocation7 + $0x2c] sm:$0xf]
        %v2032 = vld [vmem:[#allocation7 + $0x30] sm:$0xf]
        %v2033 = vld [vmem:[#allocation7 + $0x34] sm:$0xf]
        %v2034 = vld [vmem:[#allocation7 + $0x38] sm:$0xf]
        %v2035 = vld [vmem:[#allocation7 + $0x3c] sm:$0xf]
        %v2036 = vld [vmem:[#allocation7 + $0x40] sm:$0xf]
        %v2037 = vld [vmem:[#allocation7 + $0x44] sm:$0xf]
        %v2038 = vld [vmem:[#allocation7 + $0x48] sm:$0xf]
        %v2039 = vld [vmem:[#allocation7 + $0x4c] sm:$0xf]
        %v2040 = vld [vmem:[#allocation7 + $0x50] sm:$0xf]
        %v2041 = vld [vmem:[#allocation7 + $0x54] sm:$0xf]
        %v2042 = vld [vmem:[#allocation7 + $0x58] sm:$0xf]
        %v2043 = vld [vmem:[#allocation7 + $0x5c] sm:$0xf]
        %v2044 = vld [vmem:[#allocation7 + $0x60] sm:$0xf]
        %v2045 = vld [vmem:[#allocation7 + $0x64] sm:$0xf]
        %v2046 = vld [vmem:[#allocation7 + $0x68] sm:$0xf]
        %v2047 = vld [vmem:[#allocation7 + $0x6c] sm:$0xf]
        %v2048 = vld [vmem:[#allocation7 + $0x70] sm:$0xf]
        %v2049 = vld [vmem:[#allocation7 + $0x74] sm:$0xf]
        %v2050 = vld [vmem:[#allocation7 + $0x78] sm:$0xf]
        %v2051 = vld [vmem:[#allocation7 + $0x7c] sm:$0xf]
        %v2052 = vld [vmem:[%s14] sm:$0x1]
        %v2054 = vlaneseq
        %v2055 = vshrl.u32 %v2054, 7
        %v2056 = vsub.s32 0, %v2055
        %v2057 = vrot.slane %v2052, %v2056
        %v2091 = vunpack.c.l.b16 %v2020
        %v2092 = vunpack.c.l.b16 %v2021
        %v2093 = vunpack.c.l.b16 %v2022
        %v2094 = vunpack.c.l.b16 %v2023
        %v2095 = vunpack.c.l.b16 %v2024
        %v2096 = vunpack.c.l.b16 %v2025
        %v2097 = vunpack.c.l.b16 %v2026
        %v2098 = vunpack.c.l.b16 %v2027
        %v2099 = vunpack.c.l.b16 %v2028
        %v2100 = vunpack.c.l.b16 %v2029
        %v2101 = vunpack.c.l.b16 %v2030
        %v2102 = vunpack.c.l.b16 %v2031
        %v2103 = vunpack.c.l.b16 %v2032
        %v2104 = vunpack.c.l.b16 %v2033
        %v2105 = vunpack.c.l.b16 %v2034
        %v2106 = vunpack.c.l.b16 %v2035
        %v2107 = vunpack.c.l.b16 %v2036
        %v2108 = vunpack.c.l.b16 %v2037
        %v2109 = vunpack.c.l.b16 %v2038
        %v2110 = vunpack.c.l.b16 %v2039
        %v2111 = vunpack.c.l.b16 %v2040
        %v2112 = vunpack.c.l.b16 %v2041
        %v2113 = vunpack.c.l.b16 %v2042
        %v2114 = vunpack.c.l.b16 %v2043
        %v2115 = vunpack.c.l.b16 %v2044
        %v2116 = vunpack.c.l.b16 %v2045
        %v2117 = vunpack.c.l.b16 %v2046
        %v2118 = vunpack.c.l.b16 %v2047
        %v2119 = vunpack.c.l.b16 %v2048
        %v2120 = vunpack.c.l.b16 %v2049
        %v2121 = vunpack.c.l.b16 %v2050
        %v2122 = vunpack.c.l.b16 %v2051
        %v2123 = vpack.c.b16 %v2092, %v2091
        %v2124 = vpack.c.b16 %v2094, %v2093
        %v2125 = vpack.c.b16 %v2096, %v2095
        %v2126 = vpack.c.b16 %v2098, %v2097
        %v2127 = vpack.c.b16 %v2100, %v2099
        %v2128 = vpack.c.b16 %v2102, %v2101
        %v2129 = vpack.c.b16 %v2104, %v2103
        %v2130 = vpack.c.b16 %v2106, %v2105
        %v2131 = vpack.c.b16 %v2108, %v2107
        %v2132 = vpack.c.b16 %v2110, %v2109
        %v2133 = vpack.c.b16 %v2112, %v2111
        %v2134 = vpack.c.b16 %v2114, %v2113
        %v2135 = vpack.c.b16 %v2116, %v2115
        %v2136 = vpack.c.b16 %v2118, %v2117
        %v2137 = vpack.c.b16 %v2120, %v2119
        %v2138 = vpack.c.b16 %v2122, %v2121
        %2155 = vmatprep.subr.bf16.mxu0 0
        %2156 = vmatpush1.bf16.msra.mxu0 %v2123
        %2157 = vmatprep.subr.bf16.mxu0 0
        %2158 = vmatpush1.bf16.msra.mxu0 %v2124
        %2159 = vmatprep.subr.bf16.mxu0 0
        %2160 = vmatpush1.bf16.msra.mxu0 %v2125
        %2161 = vmatprep.subr.bf16.mxu0 0
        %2162 = vmatpush1.bf16.msra.mxu0 %v2126
        %2163 = vmatprep.subr.bf16.mxu0 0
        %2164 = vmatpush1.bf16.msra.mxu0 %v2127
        %2165 = vmatprep.subr.bf16.mxu0 0
        %2166 = vmatpush1.bf16.msra.mxu0 %v2128
        %2167 = vmatprep.subr.bf16.mxu0 0
        %2168 = vmatpush1.bf16.msra.mxu0 %v2129
        %2169 = vmatprep.subr.bf16.mxu0 0
        %2170 = vmatpush1.bf16.msra.mxu0 %v2130
        %2171 = vmatprep.subr.bf16.mxu0 0
        %2172 = vmatpush1.bf16.msra.mxu0 %v2131
        %2173 = vmatprep.subr.bf16.mxu0 0
        %2174 = vmatpush1.bf16.msra.mxu0 %v2132
        %2175 = vmatprep.subr.bf16.mxu0 0
        %2176 = vmatpush1.bf16.msra.mxu0 %v2133
        %2177 = vmatprep.subr.bf16.mxu0 0
        %2178 = vmatpush1.bf16.msra.mxu0 %v2134
        %2179 = vmatprep.subr.bf16.mxu0 0
        %2180 = vmatpush1.bf16.msra.mxu0 %v2135
        %2181 = vmatprep.subr.bf16.mxu0 0
        %2182 = vmatpush1.bf16.msra.mxu0 %v2136
        %2183 = vmatprep.subr.bf16.mxu0 0
        %2184 = vmatpush1.bf16.msra.mxu0 %v2137
        %2185 = vmatprep.subr.bf16.mxu0 0
        %2186 = vmatpush1.bf16.msra.mxu0 %v2138
        %2187 = vmatprep.mubr.bf16.mxu0 %v2019
        %2188 = vmatmul.mubr.bf16.gmra.mrb[0].mxu0 %v2018
        %v2189 = vpop.f32.mrb[0].mxu0
        %v2190 = vadd.f32 %v2057, %v2189
        %v2191 = vpop.f32.mrb[0].mxu0
        %v2192 = vpop.f32.mrb[0].mxu0
        %v2193 = vpop.f32.mrb[0].mxu0
        %2194 = vdwg.mxu0
        %v2195 = vmul.f32 %v2190, %v2190
        %v2196 = vmul.f32 %v2190, %v2195
        %v2197 = vmul.f32 %v2196, 0.044715
        %v2198 = vadd.f32 %v2190, %v2197
        %v2199 = vmul.f32 %v2198, 0.7978846
        %v2200 = vtanh.pop %v2199
        %v2201 = vadd.f32 %v2200, 1.0
        %v2202 = vmul.f32 %v2201, 0.5
        %v2203 = vmul.f32 %v2190, %v2202
        %v2204 = vld [vmem:[%s7] sm:$0x1]
        %v2205 = vld [vmem:[%s8] sm:$0x1]
        %2206 = vadd.xlane.f32.xlu0 %v1645
        %v2207 = vpop.xlane.xlu0 %2206
        %v2208 = vrcp.pop 128.0
        %v2209 = vmul.f32 %v2207, %v2208
        %v2210 = vsub.f32 %v1645, %v2209
        %v2211 = vmul.f32 %v2210, %v2210
        %2212 = vadd.xlane.f32.xlu0 %v2211
        %v2213 = vpop.xlane.xlu0 %2212
        %v2214 = vmul.f32 %v2213, %v2208
        %v2215 = vadd.f32 %v2214, 1e-05
        %v2216 = vrsqrt.pop %v2215
        %v2217 = vmul.f32 %v2210, %v2216
        %v2219 = vlaneseq
        %v2220 = vshrl.u32 %v2219, 7
        %v2221 = vsub.s32 0, %v2220
        %v2222 = vrot.slane %v2204, %v2221
        %v2224 = vmul.f32 %v2217, %v2222
        %v2226 = vlaneseq
        %v2227 = vshrl.u32 %v2226, 7
        %v2228 = vsub.s32 0, %v2227
        %v2229 = vrot.slane %v2205, %v2228
        %v2231 = vadd.f32 %v2224, %v2229
        %v2232 = vmul.f32 %v2231, %v2231
        %v2233 = vmul.f32 %v2231, %v2232
        %v2234 = vmul.f32 %v2233, 0.044715
        %v2235 = vadd.f32 %v2231, %v2234
        %v2236 = vmul.f32 %v2235, 0.7978846
        %v2237 = vtanh.pop %v2236
        %v2238 = vadd.f32 %v2237, 1.0
        %v2239 = vmul.f32 %v2238, 0.5
        %v2240 = vmul.f32 %v2231, %v2239
        %v2241 = vpack.c.bf16 %v2240, %v2240
        %v2242 = vld [vmem:[#allocation9] sm:$0xf]
        %v2243 = vld [vmem:[#allocation9 + $0x4] sm:$0xf]
        %v2244 = vld [vmem:[#allocation9 + $0x8] sm:$0xf]
        %v2245 = vld [vmem:[#allocation9 + $0xc] sm:$0xf]
        %v2246 = vld [vmem:[#allocation9 + $0x10] sm:$0xf]
        %v2247 = vld [vmem:[#allocation9 + $0x14] sm:$0xf]
        %v2248 = vld [vmem:[#allocation9 + $0x18] sm:$0xf]
        %v2249 = vld [vmem:[#allocation9 + $0x1c] sm:$0xf]
        %v2250 = vld [vmem:[#allocation9 + $0x20] sm:$0xf]
        %v2251 = vld [vmem:[#allocation9 + $0x24] sm:$0xf]
        %v2252 = vld [vmem:[#allocation9 + $0x28] sm:$0xf]
        %v2253 = vld [vmem:[#allocation9 + $0x2c] sm:$0xf]
        %v2254 = vld [vmem:[#allocation9 + $0x30] sm:$0xf]
        %v2255 = vld [vmem:[#allocation9 + $0x34] sm:$0xf]
        %v2256 = vld [vmem:[#allocation9 + $0x38] sm:$0xf]
        %v2257 = vld [vmem:[#allocation9 + $0x3c] sm:$0xf]
        %v2258 = vld [vmem:[%s16] sm:$0x1]
        %v2260 = vlaneseq
        %v2261 = vshrl.u32 %v2260, 7
        %v2262 = vsub.s32 0, %v2261
        %v2263 = vrot.slane %v2258, %v2262
        %v2281 = vunpack.c.l.b16 %v2242
        %v2282 = vunpack.c.l.b16 %v2243
        %v2283 = vunpack.c.l.b16 %v2244
        %v2284 = vunpack.c.l.b16 %v2245
        %v2285 = vunpack.c.l.b16 %v2246
        %v2286 = vunpack.c.l.b16 %v2247
        %v2287 = vunpack.c.l.b16 %v2248
        %v2288 = vunpack.c.l.b16 %v2249
        %v2289 = vunpack.c.l.b16 %v2250
        %v2290 = vunpack.c.l.b16 %v2251
        %v2291 = vunpack.c.l.b16 %v2252
        %v2292 = vunpack.c.l.b16 %v2253
        %v2293 = vunpack.c.l.b16 %v2254
        %v2294 = vunpack.c.l.b16 %v2255
        %v2295 = vunpack.c.l.b16 %v2256
        %v2296 = vunpack.c.l.b16 %v2257
        %v2297 = vpack.c.b16 %v2282, %v2281
        %v2298 = vpack.c.b16 %v2284, %v2283
        %v2299 = vpack.c.b16 %v2286, %v2285
        %v2300 = vpack.c.b16 %v2288, %v2287
        %v2301 = vpack.c.b16 %v2290, %v2289
        %v2302 = vpack.c.b16 %v2292, %v2291
        %v2303 = vpack.c.b16 %v2294, %v2293
        %v2304 = vpack.c.b16 %v2296, %v2295
        %2313 = vmatprep.subr.bf16.mxu0 0
        %2314 = vmatpush1.bf16.msra.mxu0 %v2297
        %2315 = vmatprep.subr.bf16.mxu0 0
        %2316 = vmatpush1.bf16.msra.mxu0 %v2298
        %2317 = vmatprep.subr.bf16.mxu0 0
        %2318 = vmatpush1.bf16.msra.mxu0 %v2299
        %2319 = vmatprep.subr.bf16.mxu0 0
        %2320 = vmatpush1.bf16.msra.mxu0 %v2300
        %2321 = vmatprep.subr.bf16.mxu0 0
        %2322 = vmatpush1.bf16.msra.mxu0 %v2301
        %2323 = vmatprep.subr.bf16.mxu0 0
        %2324 = vmatpush1.bf16.msra.mxu0 %v2302
        %2325 = vmatprep.subr.bf16.mxu0 0
        %2326 = vmatpush1.bf16.msra.mxu0 %v2303
        %2327 = vmatprep.subr.bf16.mxu0 0
        %2328 = vmatpush1.bf16.msra.mxu0 %v2304
        %2329 = vmatprep.subr.bf16.mxu0 0
        %2330 = vmatpush1.bf16.msra.mxu0 0
        %2331 = vmatprep.subr.bf16.mxu0 0
        %2332 = vmatpush1.bf16.msra.mxu0 0
        %2333 = vmatprep.subr.bf16.mxu0 0
        %2334 = vmatpush1.bf16.msra.mxu0 0
        %2335 = vmatprep.subr.bf16.mxu0 0
        %2336 = vmatpush1.bf16.msra.mxu0 0
        %2337 = vmatprep.subr.bf16.mxu0 0
        %2338 = vmatpush1.bf16.msra.mxu0 0
        %2339 = vmatprep.subr.bf16.mxu0 0
        %2340 = vmatpush1.bf16.msra.mxu0 0
        %2341 = vmatprep.subr.bf16.mxu0 0
        %2342 = vmatpush1.bf16.msra.mxu0 0
        %2343 = vmatprep.subr.bf16.mxu0 0
        %2344 = vmatpush1.bf16.msra.mxu0 0
        %2345 = vmatprep.mubr.bf16.mxu0 0
        %2346 = vmatmul.mubr.bf16.gmra.mrb[0].mxu0 %v2241
        %v2347 = vpop.f32.mrb[0].mxu0
        %v2348 = vadd.f32 %v2263, %v2347
        %v2349 = vpop.f32.mrb[0].mxu0
        %v2350 = vpop.f32.mrb[0].mxu0
        %v2351 = vpop.f32.mrb[0].mxu0
        %2352 = vdwg.mxu0
        %v2353 = vmul.f32 %v2348, %v2348
        %v2354 = vmul.f32 %v2348, %v2353
        %v2355 = vmul.f32 %v2354, 0.044715
        %v2356 = vadd.f32 %v2348, %v2355
        %v2357 = vmul.f32 %v2356, 0.7978846
        %v2358 = vtanh.pop %v2357
        %v2359 = vadd.f32 %v2358, 1.0
        %v2360 = vmul.f32 %v2359, 0.5
        %v2361 = vmul.f32 %v2348, %v2360
        %v2362 = vpack.c.bf16 %v2203, %v2203
        %v2363 = vpack.c.bf16 %v2361, %v2361
        %v2364 = vld [vmem:[%s17] sm:$0x3]
        %v2365 = vld [vmem:[%s18] sm:$0x3]
        %2367 = vset.pattern.permute.xlu0 0
        %2368 = vperm.xlu0 %2367, %v2365
        %v2369 = vpop.permute.xlu0 %2368
        %v2373 = vunpack.c.l.s4 1966171168
        %v2374 = vunpack.c.0.s8 %v2373
        %v2375 = vlaneseq
        %v2376 = vshrl.u32 %v2375, 7
        %v2377 = vsub.s32 %v2374, %v2376
        %v2378 = vrot.slane %v2364, %v2377
        %v2379 = vcombine.high %v2378, %v2378
        %v2381 = vunpack.c.l.s4 1966171168
        %v2382 = vunpack.c.0.s8 %v2381
        %v2383 = vlaneseq
        %v2384 = vshrl.u32 %v2383, 7
        %v2385 = vsub.s32 %v2382, %v2384
        %v2386 = vrot.slane %v2378, %v2385
        %v2388 = vunpack.c.l.s4 1966171168
        %v2389 = vunpack.c.0.s8 %v2388
        %v2390 = vlaneseq
        %v2391 = vshrl.u32 %v2390, 7
        %v2392 = vsub.s32 %v2389, %v2391
        %v2393 = vrot.slane %v2379, %v2392
        %2396 = vmatprep.subr.bf16.mxu0 %v2363
        %2397 = vmatpush1.bf16.xpose.msra.mxu0 %v2362
        %2398 = vmatprep.subr.bf16.mxu0 0
        %2399 = vmatpush1.bf16.xpose.msra.mxu0 0
        %2400 = vmatprep.subr.bf16.mxu0 0
        %2401 = vmatpush1.bf16.xpose.msra.mxu0 0
        %2402 = vmatprep.subr.bf16.mxu0 0
        %2403 = vmatpush1.bf16.xpose.msra.mxu0 0
        %2404 = vmatprep.subr.bf16.mxu0 0
        %2405 = vmatpush1.bf16.xpose.msra.mxu0 0
        %2406 = vmatprep.subr.bf16.mxu0 0
        %2407 = vmatpush1.bf16.xpose.msra.mxu0 0
        %2408 = vmatprep.subr.bf16.mxu0 0
        %2409 = vmatpush1.bf16.xpose.msra.mxu0 0
        %2410 = vmatprep.subr.bf16.mxu0 0
        %2411 = vmatpush1.bf16.xpose.msra.mxu0 0
        %2412 = vmatprep.subr.bf16.mxu0 0
        %2413 = vmatpush1.bf16.xpose.msra.mxu0 0
        %2414 = vmatprep.subr.bf16.mxu0 0
        %2415 = vmatpush1.bf16.xpose.msra.mxu0 0
        %2416 = vmatprep.subr.bf16.mxu0 0
        %2417 = vmatpush1.bf16.xpose.msra.mxu0 0
        %2418 = vmatprep.subr.bf16.mxu0 0
        %2419 = vmatpush1.bf16.xpose.msra.mxu0 0
        %2420 = vmatprep.subr.bf16.mxu0 0
        %2421 = vmatpush1.bf16.xpose.msra.mxu0 0
        %2422 = vmatprep.subr.bf16.mxu0 0
        %2423 = vmatpush1.bf16.xpose.msra.mxu0 0
        %2424 = vmatprep.subr.bf16.mxu0 0
        %2425 = vmatpush1.bf16.xpose.msra.mxu0 0
        %2426 = vmatprep.subr.bf16.mxu0 0
        %2427 = vmatpush1.bf16.xpose.msra.mxu0 0
        %2428 = vmatprep.mubr.bf16.mxu0 %v2393
        %2429 = vmatmul.mubr.bf16.gmra.mrb[0].mxu0 %v2386
        %v2430 = vpop.f32.mrb[0].mxu0
        %v2431 = vadd.f32 %v2369, %v2430
        %v2432 = vpop.f32.mrb[0].mxu0
        %v2433 = vpop.f32.mrb[0].mxu0
        %v2434 = vpop.f32.mrb[0].mxu0
        %2435 = vdwg.mxu0
        %v2436 = vlaneseq
        %v2437 = vshrl.u32 %v2436, 7
        %v2438 = vmax.f32 %v2431, 0.0
        %v2439 = vand.u32 2147483647, %v2431
        %v2440 = vsub.f32 0.0, %v2439
        %v2441 = vmul.f32 %v2440, 1.442695
        %v2442 = vpow.pop %v2441
        %v2443 = vadd.f32 %v2442, 1.0
        %v2444 = vlog2.pop %v2443
        %v2445 = vmul.f32 %v2444, 0.6931472
        %v2446 = vadd.f32 %v2438, %v2445
        %v2447 = vxor.u32 %v2446, 2147483648
        %v2448 = vmul.f32 %v2447, 1.442695
        %v2449 = vpow.pop %v2448
        %v2450 = vadd.f32 %v2449, 1.0
        %v2451 = vrcp.pop %v2450
        %v2452 = vmul.f32 1.0, %v2451
        %v2453 = vmul.f32 %v2452, 0.25
        %v2454 = vadd.f32 %v2453, 0.03
        %v2455 = vxor.u32 %v2431, 2147483648
        %v2456 = vmul.f32 %v2455, 1.442695
        %v2457 = vpow.pop %v2456
        %v2458 = vadd.f32 %v2457, 1.0
        %v2459 = vrcp.pop %v2458
        %v2460 = vmul.f32 1.0, %v2459
        %vm2461 = vcmp.eq.s32.totalorder %v2437, 0
        %v2462 = vsel %vm2461, %v2454, %v2460
        %vm2463 = vcmask 58368
        %2464 = vst.msk [vmem:[%s721] sm:$0x3] %vm2463, %v2462
        %p2465 = scmp.lt.s32.totalorder %s37, 1
        %s2466 = scalar_select %p2465, %s37, 1
        %p2467 = scmp.lt.s32.totalorder %s38, 0
        %s2468 = scalar_select %p2467, %s38, 0
        %s2469 = sadd.s32 %s2468, %s2466
        %s2470 = smul.addr %s2469, 2
        %s2471 = scalar_lea.vmem %s19, %s2470
        // Predicated region
        $region117: #{fixed_duration_regulator.1} parent=95 // pred_check
          %p2472 = pneg %p476
        $region118: #{fixed_duration_regulator.1} parent=95 // pred_check_branch
          %2474 = sbr.rel (%p2472) target = $region120
        $region119: #{fixed_duration_regulator.1} parent=95 // pred_region
          _
        $region120: #{fixed_duration_regulator.1} parent=95 // pred_fallthru
          _
      $region96: #{fixed_duration_regulator.1} parent=5 // pred_fallthru
        _
      %p2475 = scmp.le.s32.totalorder 2, %s28
      // Predicated region
      $region121: #{fixed_duration_regulator.1} parent=5 // pred_check
        %p2476 = pneg %p2475
      $region122: #{fixed_duration_regulator.1} parent=5 // pred_check_branch
        %2478 = sbr.rel (%p2476) target = $region124
      $region123: #{fixed_duration_regulator.1} parent=5 // pred_region
        %s2479 = ssub.s32 %s28, 2
        // Predicated region
        $region125: #{fixed_duration_regulator.1} parent=123 // pred_check
          %p2480 = pneg %p482
        $region126: #{fixed_duration_regulator.1} parent=123 // pred_check_branch
          %2482 = sbr.rel (%p2480) target = $region128
        $region127: #{fixed_duration_regulator.1} parent=123 // pred_region
          %p2483 = scmp.lt.s32.totalorder %s39, 1
          %s2484 = scalar_select %p2483, %s39, 1
          %p2485 = scmp.lt.s32.totalorder %s40, 0
          %s2486 = scalar_select %p2485, %s40, 0
          %s2487 = sadd.s32 %s2486, %s2484
          %s2488 = smul.addr %s2487, 2
          %s2489 = scalar_lea.vmem %s19, %s2488
        $region128: #{fixed_duration_regulator.1} parent=123 // pred_fallthru
          _
      $region124: #{fixed_duration_regulator.1} parent=5 // pred_fallthru
        _
    $region6: #{fixed_duration_regulator.1} parent=1 // loop_footer
      %s32 = sadd.s32 1, %s28
    $region7: #{fixed_duration_regulator.1} parent=1 // loop_footer_branch
      %27 = sbr.rel target = $region3
    $region8: #{fixed_duration_regulator.1} parent=1 // loop_exit
      _
    %2490 = vsyncpa [#allocation3], 1
    %s2491 = scalar_lea.sflag [#allocation3], 1
    %2492 = vsyncpa %s2491, 1
    %2493 = vsyncpa [#allocation5], 1
    %2494 = vsyncpa [#allocation8], 1

</llo_original>
